<compile_context>
chip_gen: v7x
topology: tpu7x:2x2x1
jax: 0.10.0
libtpu: 0.0.40
codegen_flags: <defaults>
</compile_context>

<pallas_src>
import functools

import jax
import jax.numpy as jnp
from jax.experimental import pallas as pl
from jax.experimental.pallas import tpu as pltpu

LN_EPS = 1e-5


def _layer_kernel(x_ref, wq_ref, wk_ref, wv_ref, bq_ref, bk_ref, bv_ref,
                  wo_ref, bo_ref, ln1w_ref, ln1b_ref, w1_ref, b1_ref,
                  w2_ref, b2_ref, ln2w_ref, ln2b_ref, lnfw_ref, lnfb_ref,
                  o_ref, acc_ref, *, num_heads):
    TB, N, C = x_ref.shape
    H = num_heads
    dh = C // H
    M = TB * N
    l = pl.program_id(1)

    def _norm(v):                            # f32 LayerNorm core
        mu = jnp.mean(v, axis=-1, keepdims=True)
        var = jnp.mean((v - mu) ** 2, axis=-1, keepdims=True)
        return (v - mu) * jax.lax.rsqrt(var + LN_EPS)

    # Initialize the persistent residual-stream scratch on the first layer.
    @pl.when(l == 0)
    def _():
        acc_ref[...] = x_ref[...].reshape(M, C)

    src = acc_ref[...]                       # (M, C) f32 residual stream
    src_bf = src.astype(jnp.bfloat16)

    # ---- multi-head self attention -----------------------------------------
    # Fused full-width projections (dh^-0.5 pre-folded into wq / bq).
    q = jnp.dot(src_bf, wq_ref[0], preferred_element_type=jnp.float32) + bq_ref[0]
    k = jnp.dot(src_bf, wk_ref[0], preferred_element_type=jnp.float32) + bk_ref[0]
    v = jnp.dot(src_bf, wv_ref[0], preferred_element_type=jnp.float32) + bv_ref[0]
    q3 = q.reshape(TB, N, C).astype(jnp.bfloat16)
    k3 = k.reshape(TB, N, C).astype(jnp.bfloat16)
    v3 = v.reshape(TB, N, C).astype(jnp.bfloat16)

    head_outs = []
    for h in range(H):
        sl = slice(h * dh, (h + 1) * dh)
        s = jnp.einsum("bnd,bmd->bnm", q3[..., sl], k3[..., sl],
                       preferred_element_type=jnp.float32)
        s = s - jnp.max(s, axis=-1, keepdims=True)
        p = jnp.exp(s)
        p = p * pl.reciprocal(jnp.sum(p, axis=-1, keepdims=True), approx=True)
        head_outs.append(jnp.einsum("bnm,bmd->bnd", p.astype(jnp.bfloat16),
                                    v3[..., sl],
                                    preferred_element_type=jnp.float32))
    # Lane-contiguous (M, C) head outputs -> single full-width out-projection.
    attn = jnp.concatenate(head_outs, axis=-1).reshape(M, C)
    attn = jnp.dot(attn.astype(jnp.bfloat16), wo_ref[0],
                   preferred_element_type=jnp.float32) + bo_ref[0]

    # post-LN (PyTorch TransformerEncoderLayer default, norm_first=False)
    y = _norm(src + attn) * ln1w_ref[0] + ln1b_ref[0]

    # ---- feed-forward: Linear -> ReLU -> Linear ----------------------------
    m = jnp.dot(y.astype(jnp.bfloat16), w1_ref[0],
                preferred_element_type=jnp.float32) + b1_ref[0]
    m = jnp.maximum(m, 0.0)
    m = jnp.dot(m.astype(jnp.bfloat16), w2_ref[0],
                preferred_element_type=jnp.float32) + b2_ref[0]
    out = _norm(y + m) * ln2w_ref[0] + ln2b_ref[0]
    acc_ref[...] = out

    # Encoder's final LayerNorm + 'first'-token pool, only on the last layer
    # and only on the cls rows.
    @pl.when(l == pl.num_programs(1) - 1)
    def _():
        cls = out.reshape(TB, N, C)[:, 0, :]                 # (TB, C)
        cls = _norm(cls) * lnfw_ref[...] + lnfb_ref[...]
        o_ref[...] = cls.reshape(TB, 1, C)


def _pick_tb(batch, n_tokens):
    """Batch-tile size: target ~512 MXU rows (M = TB*N), divide `batch`, and
    keep >=2 grid steps along the batch axis when possible (megacore)."""
    target = max(1, min(batch, max(1, 512 // max(n_tokens, 1))))
    divisors = [d for d in range(1, batch + 1) if batch % d == 0]
    best = None
    for d in divisors:
        if d <= target and batch // d >= 2:
            best = d
    if best is None:
        best = max(d for d in divisors if d <= target)
    return best


def _pack_params(params, num_heads):
    """Convert PyTorch-layout params to stacked, layer-streamable kernel layout."""
    layers = params["layers"]
    L = len(layers)
    C = params["lnf_w"].shape[0]
    dh = C // num_heads
    scale = dh ** -0.5
    bf16, f32 = jnp.bfloat16, jnp.float32

    def stack(name):
        return jnp.stack([p[name] for p in layers])

    def wT(w):                                  # (L, out, in) -> (L, in, out)
        return jnp.transpose(w, (0, 2, 1))

    in_w = stack("in_w")                        # (L, 3C, C)
    in_b = stack("in_b")                        # (L, 3C)

    wq = (wT(in_w[:, 0:C, :]) * scale).astype(bf16)          # scale folded in
    wk = wT(in_w[:, C:2 * C, :]).astype(bf16)
    wv = wT(in_w[:, 2 * C:3 * C, :]).astype(bf16)
    bq = (in_b[:, 0:C] * scale).reshape(L, 1, C).astype(f32)
    bk = in_b[:, C:2 * C].reshape(L, 1, C).astype(f32)
    bv = in_b[:, 2 * C:3 * C].reshape(L, 1, C).astype(f32)

    wo = wT(stack("out_w")).astype(bf16)                      # (L, C, C)
    bo = stack("out_b").reshape(L, 1, C).astype(f32)

    w1 = wT(stack("lin1_w")).astype(bf16)                     # (L, C, F)
    b1 = stack("lin1_b").reshape(L, 1, -1).astype(f32)
    w2 = wT(stack("lin2_w")).astype(bf16)                     # (L, F, C)
    b2 = stack("lin2_b").reshape(L, 1, C).astype(f32)

    ln1w = stack("ln1_w").reshape(L, 1, C).astype(f32)
    ln1b = stack("ln1_b").reshape(L, 1, C).astype(f32)
    ln2w = stack("ln2_w").reshape(L, 1, C).astype(f32)
    ln2b = stack("ln2_b").reshape(L, 1, C).astype(f32)
    lnfw = params["lnf_w"].reshape(1, C).astype(f32)
    lnfb = params["lnf_b"].reshape(1, C).astype(f32)

    return (wq, wk, wv, bq, bk, bv, wo, bo, ln1w, ln1b,
            w1, b1, w2, b2, ln2w, ln2b, lnfw, lnfb)


def aggregate_pallas(x, params, num_heads):
    """STAM `Aggregate` forward (eval mode, token_pool='first')."""
    B, S, C = x.shape
    depth = len(params["layers"])
    assert C % num_heads == 0
    H = num_heads
    F = params["layers"][0]["lin1_w"].shape[0]
    N = S + 1
    L = depth

    # Cheap host-side prep: pos-embed add + cls-token prepend (plain jnp glue).
    cls = jnp.broadcast_to(params["cls"].reshape(1, 1, C), (B, 1, C))
    x_tok = jnp.concatenate(
        [cls, x + params["pos_embed"].reshape(1, S, C)], axis=1
    ).astype(jnp.float32)                                        # (B, N, C)

    weights = _pack_params(params, num_heads)
    tb = _pick_tb(B, N)

    def per_layer(shape):                       # one layer's slab per grid step
        nd = len(shape)
        return pl.BlockSpec((1,) + shape, lambda b, l: (l,) + (0,) * nd)

    def shared(shape):                          # constant across the whole grid
        return pl.BlockSpec(shape, lambda b, l: (0,) * len(shape))

    in_specs = [
        pl.BlockSpec((tb, N, C), lambda b, l: (b, 0, 0)),          # tokens
        per_layer((C, C)), per_layer((C, C)), per_layer((C, C)),   # wq wk wv
        per_layer((1, C)), per_layer((1, C)), per_layer((1, C)),   # bq bk bv
        per_layer((C, C)), per_layer((1, C)),                      # wo, bo
        per_layer((1, C)), per_layer((1, C)),                      # ln1 w,b
        per_layer((C, F)), per_layer((1, F)),                      # fc1 w,b
        per_layer((F, C)), per_layer((1, C)),                      # fc2 w,b
        per_layer((1, C)), per_layer((1, C)),                      # ln2 w,b
        shared((1, C)), shared((1, C)),                            # final LN
    ]

    # VMEM budget: ~2 streamed layers of bf16 weights + activations + headroom.
    layer_w_bytes = 2 * (4 * C * C + 2 * C * F) + 4 * (8 * C + F)
    act_bytes = 4 * tb * N * (4 * C + F)
    est = 2 * (layer_w_bytes + 4 * tb * N * C) + act_bytes + (4 << 20)
    vmem_limit = int(min(max(est, 32 << 20), 96 << 20))

    flops = 2 * B * N * L * (4 * C * C + 2 * C * F + 2 * N * C)
    transcendentals = L * B * H * N * N
    bytes_accessed = ((B // tb) * L * 2 * (4 * C * C + 2 * C * F)
                      + x_tok.size * 4 + B * C * 4)
    cost = pl.CostEstimate(flops=int(flops),
                           transcendentals=int(transcendentals),
                           bytes_accessed=int(bytes_accessed))

    kernel = functools.partial(_layer_kernel, num_heads=H)
    out = pl.pallas_call(
        kernel,
        out_shape=jax.ShapeDtypeStruct((B, 1, C), jnp.float32),
        grid_spec=pltpu.PrefetchScalarGridSpec(
            num_scalar_prefetch=0,
            grid=(B // tb, L),
            in_specs=in_specs,
            out_specs=pl.BlockSpec((tb, 1, C), lambda b, l: (b, 0, 0)),
            scratch_shapes=[pltpu.VMEM((tb * N, C), jnp.float32)],
        ),
        compiler_params=pltpu.CompilerParams(
            dimension_semantics=("parallel", "arbitrary"),
            vmem_limit_bytes=vmem_limit),
        cost_estimate=cost,
    )(x_tok, *weights)
    return out[:, 0, :]


def aggregate_ref(x, params, num_heads):
    """Plain-JAX (f32) reference mirroring the PyTorch forward (eval mode)."""
    B, S, C = x.shape
    H, dh = num_heads, C // num_heads

    def ln(v, w, b):
        mu = jnp.mean(v, axis=-1, keepdims=True)
        var = jnp.mean((v - mu) ** 2, axis=-1, keepdims=True)
        return (v - mu) / jnp.sqrt(var + LN_EPS) * w + b

    h = x + params["pos_embed"].reshape(1, S, C)
    cls = jnp.broadcast_to(params["cls"].reshape(1, 1, C), (B, 1, C))
    h = jnp.concatenate([cls, h], axis=1)                        # (B, N, C)

    for p in params["layers"]:
        qkv = h @ p["in_w"].T + p["in_b"]                        # (B, N, 3C)
        q, k, v = jnp.split(qkv, 3, axis=-1)
        sp = lambda t: t.reshape(B, -1, H, dh).transpose(0, 2, 1, 3)
        q, k, v = sp(q), sp(k), sp(v)
        s = jnp.einsum("bhnd,bhmd->bhnm", q, k) * (dh ** -0.5)
        a = jax.nn.softmax(s, axis=-1)
        o = jnp.einsum("bhnm,bhmd->bhnd", a, v).transpose(0, 2, 1, 3).reshape(B, -1, C)
        o = o @ p["out_w"].T + p["out_b"]
        h = ln(h + o, p["ln1_w"], p["ln1_b"])                    # post-LN
        f = jax.nn.relu(h @ p["lin1_w"].T + p["lin1_b"]) @ p["lin2_w"].T + p["lin2_b"]
        h = ln(h + f, p["ln2_w"], p["ln2_b"])

    h = ln(h, params["lnf_w"], params["lnf_b"])                  # encoder's final norm
    return h[:, 0]                                               # token_pool='first'


def init_params(key, embed_dim, num_heads, hidden_dim, depth, size):
    C, F = embed_dim, hidden_dim
    keys = jax.random.split(key, depth * 6 + 2)
    s = 0.02
    layers = []
    ki = 0
    for _ in range(depth):
        layers.append({
            "in_w": s * jax.random.normal(keys[ki], (3 * C, C), jnp.float32),
            "in_b": s * jax.random.normal(keys[ki + 1], (3 * C,), jnp.float32),
            "out_w": s * jax.random.normal(keys[ki + 2], (C, C), jnp.float32),
            "out_b": jnp.zeros((C,), jnp.float32),
            "ln1_w": jnp.ones((C,), jnp.float32),
            "ln1_b": jnp.zeros((C,), jnp.float32),
            "lin1_w": s * jax.random.normal(keys[ki + 3], (F, C), jnp.float32),
            "lin1_b": s * jax.random.normal(keys[ki + 4], (F,), jnp.float32),
            "lin2_w": s * jax.random.normal(keys[ki + 5], (C, F), jnp.float32),
            "lin2_b": jnp.zeros((C,), jnp.float32),
            "ln2_w": jnp.ones((C,), jnp.float32),
            "ln2_b": jnp.zeros((C,), jnp.float32),
        })
        ki += 6
    return {
        "layers": layers,
        "lnf_w": jnp.ones((C,), jnp.float32),
        "lnf_b": jnp.zeros((C,), jnp.float32),
        "pos_embed": s * jax.random.normal(keys[ki], (1, size, C), jnp.float32),
        "cls": s * jax.random.normal(keys[ki + 1], (1, 1, C), jnp.float32),
    }


if __name__ == "__main__":
    B, S, C = 2, 16, 32          # batch, size (tokens), embed_dim
    num_heads, hidden, depth = 4, 64, 2

    key = jax.random.PRNGKey(0)
    kx, kp = jax.random.split(key)
    x = jax.random.normal(kx, (B, S, C), jnp.float32)
    params = init_params(kp, C, num_heads, hidden, depth, S)

    out = aggregate_pallas(x, params, num_heads)
    out = jax.block_until_ready(out)

    ref = aggregate_ref(x, params, num_heads)
    assert out.shape == (B, C)
    # bf16 MXU operands + approx reciprocal -> slightly looser tolerance vs f32 ref.
    assert jnp.allclose(out, ref, rtol=2e-2, atol=2e-2), (
        "mismatch vs reference, max abs diff = %f" % float(jnp.max(jnp.abs(out - ref))))

    print("KERNEL_OK")
</pallas_src>

<mosaic_0001>
module attributes {stable_mosaic.version = 11 : i64} {
  func.func @_layer_kernel(%arg0: i32, %arg1: i32, %arg2: memref<1x17x32xf32, #tpu.memory_space<vmem>>, %arg3: memref<1x32x32xbf16, #tpu.memory_space<vmem>>, %arg4: memref<1x32x32xbf16, #tpu.memory_space<vmem>>, %arg5: memref<1x32x32xbf16, #tpu.memory_space<vmem>>, %arg6: memref<1x1x32xf32, #tpu.memory_space<vmem>>, %arg7: memref<1x1x32xf32, #tpu.memory_space<vmem>>, %arg8: memref<1x1x32xf32, #tpu.memory_space<vmem>>, %arg9: memref<1x32x32xbf16, #tpu.memory_space<vmem>>, %arg10: memref<1x1x32xf32, #tpu.memory_space<vmem>>, %arg11: memref<1x1x32xf32, #tpu.memory_space<vmem>>, %arg12: memref<1x1x32xf32, #tpu.memory_space<vmem>>, %arg13: memref<1x32x64xbf16, #tpu.memory_space<vmem>>, %arg14: memref<1x1x64xf32, #tpu.memory_space<vmem>>, %arg15: memref<1x64x32xbf16, #tpu.memory_space<vmem>>, %arg16: memref<1x1x32xf32, #tpu.memory_space<vmem>>, %arg17: memref<1x1x32xf32, #tpu.memory_space<vmem>>, %arg18: memref<1x1x32xf32, #tpu.memory_space<vmem>>, %arg19: memref<1x32xf32, #tpu.memory_space<vmem>>, %arg20: memref<1x32xf32, #tpu.memory_space<vmem>>, %arg21: memref<1x1x32xf32, #tpu.memory_space<vmem>>, %arg22: memref<17x32xf32, #tpu.memory_space<vmem>>) attributes {dimension_semantics = [#tpu.dimension_semantics<parallel>, #tpu.dimension_semantics<arbitrary>], iteration_bounds = array<i64: 2, 2>, scalar_prefetch = 0 : i64, scratch_operands = 1 : i64, tpu.core_type = #tpu.core_type<tc>, window_params = [{transform_indices = @transform_0, window_bounds = array<i64: 1, 17, 32>}, {transform_indices = @transform_1, window_bounds = array<i64: 1, 32, 32>}, {transform_indices = @transform_2, window_bounds = array<i64: 1, 32, 32>}, {transform_indices = @transform_3, window_bounds = array<i64: 1, 32, 32>}, {transform_indices = @transform_4, window_bounds = array<i64: 1, 1, 32>}, {transform_indices = @transform_5, window_bounds = array<i64: 1, 1, 32>}, {transform_indices = @transform_6, window_bounds = array<i64: 1, 1, 32>}, {transform_indices = @transform_7, window_bounds = array<i64: 1, 32, 32>}, {transform_indices = @transform_8, window_bounds = array<i64: 1, 1, 32>}, {transform_indices = @transform_9, window_bounds = array<i64: 1, 1, 32>}, {transform_indices = @transform_10, window_bounds = array<i64: 1, 1, 32>}, {transform_indices = @transform_11, window_bounds = array<i64: 1, 32, 64>}, {transform_indices = @transform_12, window_bounds = array<i64: 1, 1, 64>}, {transform_indices = @transform_13, window_bounds = array<i64: 1, 64, 32>}, {transform_indices = @transform_14, window_bounds = array<i64: 1, 1, 32>}, {transform_indices = @transform_15, window_bounds = array<i64: 1, 1, 32>}, {transform_indices = @transform_16, window_bounds = array<i64: 1, 1, 32>}, {pipeline_mode = #tpu.pipeline_mode<synchronous>, transform_indices = @transform_17, window_bounds = array<i64: 1, 32>}, {pipeline_mode = #tpu.pipeline_mode<synchronous>, transform_indices = @transform_18, window_bounds = array<i64: 1, 32>}, {transform_indices = @transform_19, window_bounds = array<i64: 1, 1, 32>}]} {
    %c0_i32 = arith.constant 0 : i32
    %0 = arith.cmpi eq, %arg1, %c0_i32 : i32
    %1 = arith.extui %0 : i1 to i32
    %c0_i32_0 = arith.constant 0 : i32
    %2 = arith.cmpi ne, %1, %c0_i32_0 : i32
    scf.if %2 {
      %c0_85 = arith.constant 0 : index
      %c0_86 = arith.constant 0 : index
      %c0_87 = arith.constant 0 : index
      %182 = vector.load %arg2[%c0_85, %c0_86, %c0_87] : memref<1x17x32xf32, #tpu.memory_space<vmem>>, vector<1x17x32xf32>
      %183 = vector.shape_cast %182 : vector<1x17x32xf32> to vector<17x32xf32>
      %c0_88 = arith.constant 0 : index
      %c0_89 = arith.constant 0 : index
      %184 = vector.load %arg22[%c0_88, %c0_89] : memref<17x32xf32, #tpu.memory_space<vmem>>, vector<17x32xf32>
      tpu.vector_store %arg22[%c0_88, %c0_89], %183 {strides = array<i32>} : memref<17x32xf32, #tpu.memory_space<vmem>>, vector<17x32xf32>,
    } else {
    }
    %c0 = arith.constant 0 : index
    %c0_1 = arith.constant 0 : index
    %3 = vector.load %arg22[%c0, %c0_1] : memref<17x32xf32, #tpu.memory_space<vmem>>, vector<17x32xf32>
    %4 = arith.truncf %3 : vector<17x32xf32> to vector<17x32xbf16>
    %c0_2 = arith.constant 0 : index
    %c0_3 = arith.constant 0 : index
    %c0_4 = arith.constant 0 : index
    %5 = vector.load %arg3[%c0_2, %c0_3, %c0_4] : memref<1x32x32xbf16, #tpu.memory_space<vmem>>, vector<1x32x32xbf16>
    %6 = vector.shape_cast %5 : vector<1x32x32xbf16> to vector<32x32xbf16>
    %cst = arith.constant dense<0.000000e+00> : vector<17x32xf32>
    %7 = tpu.matmul %4, %6, %cst {dimension_numbers = #tpu.dot_dimension_numbers<[1], [0], [0], [1], [0, 0, 1, 1], [], []>} : vector<17x32xbf16>, vector<32x32xbf16>, vector<17x32xf32> -> vector<17x32xf32>
    %c0_5 = arith.constant 0 : index
    %c0_6 = arith.constant 0 : index
    %c0_7 = arith.constant 0 : index
    %8 = vector.load %arg6[%c0_5, %c0_6, %c0_7] : memref<1x1x32xf32, #tpu.memory_space<vmem>>, vector<1x1x32xf32>
    %9 = vector.shape_cast %8 : vector<1x1x32xf32> to vector<1x32xf32>
    %10 = vector.broadcast %9 : vector<1x32xf32> to vector<17x32xf32>
    %11 = arith.addf %7, %10 : vector<17x32xf32>
    %c0_8 = arith.constant 0 : index
    %c0_9 = arith.constant 0 : index
    %c0_10 = arith.constant 0 : index
    %12 = vector.load %arg4[%c0_8, %c0_9, %c0_10] : memref<1x32x32xbf16, #tpu.memory_space<vmem>>, vector<1x32x32xbf16>
    %13 = vector.shape_cast %12 : vector<1x32x32xbf16> to vector<32x32xbf16>
    %cst_11 = arith.constant dense<0.000000e+00> : vector<17x32xf32>
    %14 = tpu.matmul %4, %13, %cst_11 {dimension_numbers = #tpu.dot_dimension_numbers<[1], [0], [0], [1], [0, 0, 1, 1], [], []>} : vector<17x32xbf16>, vector<32x32xbf16>, vector<17x32xf32> -> vector<17x32xf32>
    %c0_12 = arith.constant 0 : index
    %c0_13 = arith.constant 0 : index
    %c0_14 = arith.constant 0 : index
    %15 = vector.load %arg7[%c0_12, %c0_13, %c0_14] : memref<1x1x32xf32, #tpu.memory_space<vmem>>, vector<1x1x32xf32>
    %16 = vector.shape_cast %15 : vector<1x1x32xf32> to vector<1x32xf32>
    %17 = vector.broadcast %16 : vector<1x32xf32> to vector<17x32xf32>
    %18 = arith.addf %14, %17 : vector<17x32xf32>
    %c0_15 = arith.constant 0 : index
    %c0_16 = arith.constant 0 : index
    %c0_17 = arith.constant 0 : index
    %19 = vector.load %arg5[%c0_15, %c0_16, %c0_17] : memref<1x32x32xbf16, #tpu.memory_space<vmem>>, vector<1x32x32xbf16>
    %20 = vector.shape_cast %19 : vector<1x32x32xbf16> to vector<32x32xbf16>
    %cst_18 = arith.constant dense<0.000000e+00> : vector<17x32xf32>
    %21 = tpu.matmul %4, %20, %cst_18 {dimension_numbers = #tpu.dot_dimension_numbers<[1], [0], [0], [1], [0, 0, 1, 1], [], []>} : vector<17x32xbf16>, vector<32x32xbf16>, vector<17x32xf32> -> vector<17x32xf32>
    %c0_19 = arith.constant 0 : index
    %c0_20 = arith.constant 0 : index
    %c0_21 = arith.constant 0 : index
    %22 = vector.load %arg8[%c0_19, %c0_20, %c0_21] : memref<1x1x32xf32, #tpu.memory_space<vmem>>, vector<1x1x32xf32>
    %23 = vector.shape_cast %22 : vector<1x1x32xf32> to vector<1x32xf32>
    %24 = vector.broadcast %23 : vector<1x32xf32> to vector<17x32xf32>
    %25 = arith.addf %21, %24 : vector<17x32xf32>
    %26 = vector.shape_cast %11 : vector<17x32xf32> to vector<1x17x32xf32>
    %27 = arith.truncf %26 : vector<1x17x32xf32> to vector<1x17x32xbf16>
    %28 = vector.shape_cast %18 : vector<17x32xf32> to vector<1x17x32xf32>
    %29 = arith.truncf %28 : vector<1x17x32xf32> to vector<1x17x32xbf16>
    %30 = vector.shape_cast %25 : vector<17x32xf32> to vector<1x17x32xf32>
    %31 = arith.truncf %30 : vector<1x17x32xf32> to vector<1x17x32xbf16>
    %32 = vector.extract_strided_slice %27 {offsets = [0, 0, 0], sizes = [1, 17, 8], strides = [1, 1, 1]} : vector<1x17x32xbf16> to vector<1x17x8xbf16>
    %33 = vector.extract_strided_slice %29 {offsets = [0, 0, 0], sizes = [1, 17, 8], strides = [1, 1, 1]} : vector<1x17x32xbf16> to vector<1x17x8xbf16>
    "tpu.trace_start"() <{level = 10 : i32, message = "bnd,bmd->bnm"}> : () -> ()
    %cst_22 = arith.constant dense<0.000000e+00> : vector<1x17x17xf32>
    %34 = tpu.matmul %32, %33, %cst_22 {dimension_numbers = #tpu.dot_dimension_numbers<[2], [2], [1], [1], [0, 0, 0, 1, 1, 1], [0], [0]>} : vector<1x17x8xbf16>, vector<1x17x8xbf16>, vector<1x17x17xf32> -> vector<1x17x17xf32>
    "tpu.trace_stop"() : () -> ()
    %cst_23 = arith.constant dense<0xFF800000> : vector<1x17xf32>
    %35 = vector.multi_reduction <maximumf>, %34, %cst_23 [2] : vector<1x17x17xf32> to vector<1x17xf32>
    %36 = vector.shape_cast %35 : vector<1x17xf32> to vector<1x17x1xf32>
    %37 = vector.broadcast %36 : vector<1x17x1xf32> to vector<1x17x17xf32>
    %38 = arith.subf %34, %37 : vector<1x17x17xf32>
    %39 = math.exp %38 : vector<1x17x17xf32>
    %cst_24 = arith.constant dense<0.000000e+00> : vector<1x17xf32>
    %40 = vector.multi_reduction <add>, %39, %cst_24 [2] : vector<1x17x17xf32> to vector<1x17xf32>
    %41 = vector.shape_cast %40 : vector<1x17xf32> to vector<1x17x1xf32>
    %42 = tpu.reciprocal %41 {approx = true} : vector<1x17x1xf32> -> vector<1x17x1xf32>
    %43 = vector.broadcast %42 : vector<1x17x1xf32> to vector<1x17x17xf32>
    %44 = arith.mulf %39, %43 : vector<1x17x17xf32>
    %45 = arith.truncf %44 : vector<1x17x17xf32> to vector<1x17x17xbf16>
    %46 = vector.extract_strided_slice %31 {offsets = [0, 0, 0], sizes = [1, 17, 8], strides = [1, 1, 1]} : vector<1x17x32xbf16> to vector<1x17x8xbf16>
    "tpu.trace_start"() <{level = 10 : i32, message = "bnm,bmd->bnd"}> : () -> ()
    %cst_25 = arith.constant dense<0.000000e+00> : vector<1x17x8xf32>
    %47 = tpu.matmul %45, %46, %cst_25 {dimension_numbers = #tpu.dot_dimension_numbers<[2], [1], [1], [2], [0, 0, 0, 1, 1, 2], [0], [0]>} : vector<1x17x17xbf16>, vector<1x17x8xbf16>, vector<1x17x8xf32> -> vector<1x17x8xf32>
    "tpu.trace_stop"() : () -> ()
    %48 = vector.extract_strided_slice %27 {offsets = [0, 0, 8], sizes = [1, 17, 8], strides = [1, 1, 1]} : vector<1x17x32xbf16> to vector<1x17x8xbf16>
    %49 = vector.extract_strided_slice %29 {offsets = [0, 0, 8], sizes = [1, 17, 8], strides = [1, 1, 1]} : vector<1x17x32xbf16> to vector<1x17x8xbf16>
    "tpu.trace_start"() <{level = 10 : i32, message = "bnd,bmd->bnm"}> : () -> ()
    %cst_26 = arith.constant dense<0.000000e+00> : vector<1x17x17xf32>
    %50 = tpu.matmul %48, %49, %cst_26 {dimension_numbers = #tpu.dot_dimension_numbers<[2], [2], [1], [1], [0, 0, 0, 1, 1, 1], [0], [0]>} : vector<1x17x8xbf16>, vector<1x17x8xbf16>, vector<1x17x17xf32> -> vector<1x17x17xf32>
    "tpu.trace_stop"() : () -> ()
    %cst_27 = arith.constant dense<0xFF800000> : vector<1x17xf32>
    %51 = vector.multi_reduction <maximumf>, %50, %cst_27 [2] : vector<1x17x17xf32> to vector<1x17xf32>
    %52 = vector.shape_cast %51 : vector<1x17xf32> to vector<1x17x1xf32>
    %53 = vector.broadcast %52 : vector<1x17x1xf32> to vector<1x17x17xf32>
    %54 = arith.subf %50, %53 : vector<1x17x17xf32>
    %55 = math.exp %54 : vector<1x17x17xf32>
    %cst_28 = arith.constant dense<0.000000e+00> : vector<1x17xf32>
    %56 = vector.multi_reduction <add>, %55, %cst_28 [2] : vector<1x17x17xf32> to vector<1x17xf32>
    %57 = vector.shape_cast %56 : vector<1x17xf32> to vector<1x17x1xf32>
    %58 = tpu.reciprocal %57 {approx = true} : vector<1x17x1xf32> -> vector<1x17x1xf32>
    %59 = vector.broadcast %58 : vector<1x17x1xf32> to vector<1x17x17xf32>
    %60 = arith.mulf %55, %59 : vector<1x17x17xf32>
    %61 = arith.truncf %60 : vector<1x17x17xf32> to vector<1x17x17xbf16>
    %62 = vector.extract_strided_slice %31 {offsets = [0, 0, 8], sizes = [1, 17, 8], strides = [1, 1, 1]} : vector<1x17x32xbf16> to vector<1x17x8xbf16>
    "tpu.trace_start"() <{level = 10 : i32, message = "bnm,bmd->bnd"}> : () -> ()
    %cst_29 = arith.constant dense<0.000000e+00> : vector<1x17x8xf32>
    %63 = tpu.matmul %61, %62, %cst_29 {dimension_numbers = #tpu.dot_dimension_numbers<[2], [1], [1], [2], [0, 0, 0, 1, 1, 2], [0], [0]>} : vector<1x17x17xbf16>, vector<1x17x8xbf16>, vector<1x17x8xf32> -> vector<1x17x8xf32>
    "tpu.trace_stop"() : () -> ()
    %64 = vector.extract_strided_slice %27 {offsets = [0, 0, 16], sizes = [1, 17, 8], strides = [1, 1, 1]} : vector<1x17x32xbf16> to vector<1x17x8xbf16>
    %65 = vector.extract_strided_slice %29 {offsets = [0, 0, 16], sizes = [1, 17, 8], strides = [1, 1, 1]} : vector<1x17x32xbf16> to vector<1x17x8xbf16>
    "tpu.trace_start"() <{level = 10 : i32, message = "bnd,bmd->bnm"}> : () -> ()
    %cst_30 = arith.constant dense<0.000000e+00> : vector<1x17x17xf32>
    %66 = tpu.matmul %64, %65, %cst_30 {dimension_numbers = #tpu.dot_dimension_numbers<[2], [2], [1], [1], [0, 0, 0, 1, 1, 1], [0], [0]>} : vector<1x17x8xbf16>, vector<1x17x8xbf16>, vector<1x17x17xf32> -> vector<1x17x17xf32>
    "tpu.trace_stop"() : () -> ()
    %cst_31 = arith.constant dense<0xFF800000> : vector<1x17xf32>
    %67 = vector.multi_reduction <maximumf>, %66, %cst_31 [2] : vector<1x17x17xf32> to vector<1x17xf32>
    %68 = vector.shape_cast %67 : vector<1x17xf32> to vector<1x17x1xf32>
    %69 = vector.broadcast %68 : vector<1x17x1xf32> to vector<1x17x17xf32>
    %70 = arith.subf %66, %69 : vector<1x17x17xf32>
    %71 = math.exp %70 : vector<1x17x17xf32>
    %cst_32 = arith.constant dense<0.000000e+00> : vector<1x17xf32>
    %72 = vector.multi_reduction <add>, %71, %cst_32 [2] : vector<1x17x17xf32> to vector<1x17xf32>
    %73 = vector.shape_cast %72 : vector<1x17xf32> to vector<1x17x1xf32>
    %74 = tpu.reciprocal %73 {approx = true} : vector<1x17x1xf32> -> vector<1x17x1xf32>
    %75 = vector.broadcast %74 : vector<1x17x1xf32> to vector<1x17x17xf32>
    %76 = arith.mulf %71, %75 : vector<1x17x17xf32>
    %77 = arith.truncf %76 : vector<1x17x17xf32> to vector<1x17x17xbf16>
    %78 = vector.extract_strided_slice %31 {offsets = [0, 0, 16], sizes = [1, 17, 8], strides = [1, 1, 1]} : vector<1x17x32xbf16> to vector<1x17x8xbf16>
    "tpu.trace_start"() <{level = 10 : i32, message = "bnm,bmd->bnd"}> : () -> ()
    %cst_33 = arith.constant dense<0.000000e+00> : vector<1x17x8xf32>
    %79 = tpu.matmul %77, %78, %cst_33 {dimension_numbers = #tpu.dot_dimension_numbers<[2], [1], [1], [2], [0, 0, 0, 1, 1, 2], [0], [0]>} : vector<1x17x17xbf16>, vector<1x17x8xbf16>, vector<1x17x8xf32> -> vector<1x17x8xf32>
    "tpu.trace_stop"() : () -> ()
    %80 = vector.extract_strided_slice %27 {offsets = [0, 0, 24], sizes = [1, 17, 8], strides = [1, 1, 1]} : vector<1x17x32xbf16> to vector<1x17x8xbf16>
    %81 = vector.extract_strided_slice %29 {offsets = [0, 0, 24], sizes = [1, 17, 8], strides = [1, 1, 1]} : vector<1x17x32xbf16> to vector<1x17x8xbf16>
    "tpu.trace_start"() <{level = 10 : i32, message = "bnd,bmd->bnm"}> : () -> ()
    %cst_34 = arith.constant dense<0.000000e+00> : vector<1x17x17xf32>
    %82 = tpu.matmul %80, %81, %cst_34 {dimension_numbers = #tpu.dot_dimension_numbers<[2], [2], [1], [1], [0, 0, 0, 1, 1, 1], [0], [0]>} : vector<1x17x8xbf16>, vector<1x17x8xbf16>, vector<1x17x17xf32> -> vector<1x17x17xf32>
    "tpu.trace_stop"() : () -> ()
    %cst_35 = arith.constant dense<0xFF800000> : vector<1x17xf32>
    %83 = vector.multi_reduction <maximumf>, %82, %cst_35 [2] : vector<1x17x17xf32> to vector<1x17xf32>
    %84 = vector.shape_cast %83 : vector<1x17xf32> to vector<1x17x1xf32>
    %85 = vector.broadcast %84 : vector<1x17x1xf32> to vector<1x17x17xf32>
    %86 = arith.subf %82, %85 : vector<1x17x17xf32>
    %87 = math.exp %86 : vector<1x17x17xf32>
    %cst_36 = arith.constant dense<0.000000e+00> : vector<1x17xf32>
    %88 = vector.multi_reduction <add>, %87, %cst_36 [2] : vector<1x17x17xf32> to vector<1x17xf32>
    %89 = vector.shape_cast %88 : vector<1x17xf32> to vector<1x17x1xf32>
    %90 = tpu.reciprocal %89 {approx = true} : vector<1x17x1xf32> -> vector<1x17x1xf32>
    %91 = vector.broadcast %90 : vector<1x17x1xf32> to vector<1x17x17xf32>
    %92 = arith.mulf %87, %91 : vector<1x17x17xf32>
    %93 = arith.truncf %92 : vector<1x17x17xf32> to vector<1x17x17xbf16>
    %94 = vector.extract_strided_slice %31 {offsets = [0, 0, 24], sizes = [1, 17, 8], strides = [1, 1, 1]} : vector<1x17x32xbf16> to vector<1x17x8xbf16>
    "tpu.trace_start"() <{level = 10 : i32, message = "bnm,bmd->bnd"}> : () -> ()
    %cst_37 = arith.constant dense<0.000000e+00> : vector<1x17x8xf32>
    %95 = tpu.matmul %93, %94, %cst_37 {dimension_numbers = #tpu.dot_dimension_numbers<[2], [1], [1], [2], [0, 0, 0, 1, 1, 2], [0], [0]>} : vector<1x17x17xbf16>, vector<1x17x8xbf16>, vector<1x17x8xf32> -> vector<1x17x8xf32>
    "tpu.trace_stop"() : () -> ()
    %96 = tpu.concatenate %47, %63, %79, %95 in 2 : vector<1x17x8xf32>, vector<1x17x8xf32>, vector<1x17x8xf32>, vector<1x17x8xf32> -> vector<1x17x32xf32>
    %97 = vector.shape_cast %96 : vector<1x17x32xf32> to vector<17x32xf32>
    %98 = arith.truncf %97 : vector<17x32xf32> to vector<17x32xbf16>
    %c0_38 = arith.constant 0 : index
    %c0_39 = arith.constant 0 : index
    %c0_40 = arith.constant 0 : index
    %99 = vector.load %arg9[%c0_38, %c0_39, %c0_40] : memref<1x32x32xbf16, #tpu.memory_space<vmem>>, vector<1x32x32xbf16>
    %100 = vector.shape_cast %99 : vector<1x32x32xbf16> to vector<32x32xbf16>
    %cst_41 = arith.constant dense<0.000000e+00> : vector<17x32xf32>
    %101 = tpu.matmul %98, %100, %cst_41 {dimension_numbers = #tpu.dot_dimension_numbers<[1], [0], [0], [1], [0, 0, 1, 1], [], []>} : vector<17x32xbf16>, vector<32x32xbf16>, vector<17x32xf32> -> vector<17x32xf32>
    %c0_42 = arith.constant 0 : index
    %c0_43 = arith.constant 0 : index
    %c0_44 = arith.constant 0 : index
    %102 = vector.load %arg10[%c0_42, %c0_43, %c0_44] : memref<1x1x32xf32, #tpu.memory_space<vmem>>, vector<1x1x32xf32>
    %103 = vector.shape_cast %102 : vector<1x1x32xf32> to vector<1x32xf32>
    %104 = vector.broadcast %103 : vector<1x32xf32> to vector<17x32xf32>
    %105 = arith.addf %101, %104 : vector<17x32xf32>
    %106 = arith.addf %3, %105 : vector<17x32xf32>
    %cst_45 = arith.constant dense<0.000000e+00> : vector<17xf32>
    %107 = vector.multi_reduction <add>, %106, %cst_45 [1] : vector<17x32xf32> to vector<17xf32>
    %108 = vector.shape_cast %107 : vector<17xf32> to vector<17x1xf32>
    %cst_46 = arith.constant 3.200000e+01 : f32
    %109 = vector.broadcast %cst_46 : f32 to vector<17x1xf32>
    %110 = arith.divf %108, %109 : vector<17x1xf32>
    %111 = vector.broadcast %110 : vector<17x1xf32> to vector<17x32xf32>
    %112 = arith.subf %106, %111 : vector<17x32xf32>
    %113 = arith.mulf %112, %112 : vector<17x32xf32>
    %cst_47 = arith.constant dense<0.000000e+00> : vector<17xf32>
    %114 = vector.multi_reduction <add>, %113, %cst_47 [1] : vector<17x32xf32> to vector<17xf32>
    %115 = vector.shape_cast %114 : vector<17xf32> to vector<17x1xf32>
    %cst_48 = arith.constant 3.200000e+01 : f32
    %116 = vector.broadcast %cst_48 : f32 to vector<17x1xf32>
    %117 = arith.divf %115, %116 : vector<17x1xf32>
    %118 = vector.broadcast %110 : vector<17x1xf32> to vector<17x32xf32>
    %119 = arith.subf %106, %118 : vector<17x32xf32>
    %cst_49 = arith.constant 9.99999974E-6 : f32
    %120 = vector.broadcast %cst_49 : f32 to vector<17x1xf32>
    %121 = arith.addf %117, %120 : vector<17x1xf32>
    %122 = math.rsqrt %121 : vector<17x1xf32>
    %123 = vector.broadcast %122 : vector<17x1xf32> to vector<17x32xf32>
    %124 = arith.mulf %119, %123 : vector<17x32xf32>
    %c0_50 = arith.constant 0 : index
    %c0_51 = arith.constant 0 : index
    %c0_52 = arith.constant 0 : index
    %125 = vector.load %arg11[%c0_50, %c0_51, %c0_52] : memref<1x1x32xf32, #tpu.memory_space<vmem>>, vector<1x1x32xf32>
    %126 = vector.shape_cast %125 : vector<1x1x32xf32> to vector<1x32xf32>
    %127 = vector.broadcast %126 : vector<1x32xf32> to vector<17x32xf32>
    %128 = arith.mulf %124, %127 : vector<17x32xf32>
    %c0_53 = arith.constant 0 : index
    %c0_54 = arith.constant 0 : index
    %c0_55 = arith.constant 0 : index
    %129 = vector.load %arg12[%c0_53, %c0_54, %c0_55] : memref<1x1x32xf32, #tpu.memory_space<vmem>>, vector<1x1x32xf32>
    %130 = vector.shape_cast %129 : vector<1x1x32xf32> to vector<1x32xf32>
    %131 = vector.broadcast %130 : vector<1x32xf32> to vector<17x32xf32>
    %132 = arith.addf %128, %131 : vector<17x32xf32>
    %133 = arith.truncf %132 : vector<17x32xf32> to vector<17x32xbf16>
    %c0_56 = arith.constant 0 : index
    %c0_57 = arith.constant 0 : index
    %c0_58 = arith.constant 0 : index
    %134 = vector.load %arg13[%c0_56, %c0_57, %c0_58] : memref<1x32x64xbf16, #tpu.memory_space<vmem>>, vector<1x32x64xbf16>
    %135 = vector.shape_cast %134 : vector<1x32x64xbf16> to vector<32x64xbf16>
    %cst_59 = arith.constant dense<0.000000e+00> : vector<17x64xf32>
    %136 = tpu.matmul %133, %135, %cst_59 {dimension_numbers = #tpu.dot_dimension_numbers<[1], [0], [0], [1], [0, 0, 1, 1], [], []>} : vector<17x32xbf16>, vector<32x64xbf16>, vector<17x64xf32> -> vector<17x64xf32>
    %c0_60 = arith.constant 0 : index
    %c0_61 = arith.constant 0 : index
    %c0_62 = arith.constant 0 : index
    %137 = vector.load %arg14[%c0_60, %c0_61, %c0_62] : memref<1x1x64xf32, #tpu.memory_space<vmem>>, vector<1x1x64xf32>
    %138 = vector.shape_cast %137 : vector<1x1x64xf32> to vector<1x64xf32>
    %139 = vector.broadcast %138 : vector<1x64xf32> to vector<17x64xf32>
    %140 = arith.addf %136, %139 : vector<17x64xf32>
    %cst_63 = arith.constant 0.000000e+00 : f32
    %141 = vector.broadcast %cst_63 : f32 to vector<17x64xf32>
    %142 = arith.maximumf %140, %141 : vector<17x64xf32>
    %143 = arith.truncf %142 : vector<17x64xf32> to vector<17x64xbf16>
    %c0_64 = arith.constant 0 : index
    %c0_65 = arith.constant 0 : index
    %c0_66 = arith.constant 0 : index
    %144 = vector.load %arg15[%c0_64, %c0_65, %c0_66] : memref<1x64x32xbf16, #tpu.memory_space<vmem>>, vector<1x64x32xbf16>
    %145 = vector.shape_cast %144 : vector<1x64x32xbf16> to vector<64x32xbf16>
    %cst_67 = arith.constant dense<0.000000e+00> : vector<17x32xf32>
    %146 = tpu.matmul %143, %145, %cst_67 {dimension_numbers = #tpu.dot_dimension_numbers<[1], [0], [0], [1], [0, 0, 1, 1], [], []>} : vector<17x64xbf16>, vector<64x32xbf16>, vector<17x32xf32> -> vector<17x32xf32>
    %c0_68 = arith.constant 0 : index
    %c0_69 = arith.constant 0 : index
    %c0_70 = arith.constant 0 : index
    %147 = vector.load %arg16[%c0_68, %c0_69, %c0_70] : memref<1x1x32xf32, #tpu.memory_space<vmem>>, vector<1x1x32xf32>
    %148 = vector.shape_cast %147 : vector<1x1x32xf32> to vector<1x32xf32>
    %149 = vector.broadcast %148 : vector<1x32xf32> to vector<17x32xf32>
    %150 = arith.addf %146, %149 : vector<17x32xf32>
    %151 = arith.addf %132, %150 : vector<17x32xf32>
    %cst_71 = arith.constant dense<0.000000e+00> : vector<17xf32>
    %152 = vector.multi_reduction <add>, %151, %cst_71 [1] : vector<17x32xf32> to vector<17xf32>
    %153 = vector.shape_cast %152 : vector<17xf32> to vector<17x1xf32>
    %cst_72 = arith.constant 3.200000e+01 : f32
    %154 = vector.broadcast %cst_72 : f32 to vector<17x1xf32>
    %155 = arith.divf %153, %154 : vector<17x1xf32>
    %156 = vector.broadcast %155 : vector<17x1xf32> to vector<17x32xf32>
    %157 = arith.subf %151, %156 : vector<17x32xf32>
    %158 = arith.mulf %157, %157 : vector<17x32xf32>
    %cst_73 = arith.constant dense<0.000000e+00> : vector<17xf32>
    %159 = vector.multi_reduction <add>, %158, %cst_73 [1] : vector<17x32xf32> to vector<17xf32>
    %160 = vector.shape_cast %159 : vector<17xf32> to vector<17x1xf32>
    %cst_74 = arith.constant 3.200000e+01 : f32
    %161 = vector.broadcast %cst_74 : f32 to vector<17x1xf32>
    %162 = arith.divf %160, %161 : vector<17x1xf32>
    %163 = vector.broadcast %155 : vector<17x1xf32> to vector<17x32xf32>
    %164 = arith.subf %151, %163 : vector<17x32xf32>
    %cst_75 = arith.constant 9.99999974E-6 : f32
    %165 = vector.broadcast %cst_75 : f32 to vector<17x1xf32>
    %166 = arith.addf %162, %165 : vector<17x1xf32>
    %167 = math.rsqrt %166 : vector<17x1xf32>
    %168 = vector.broadcast %167 : vector<17x1xf32> to vector<17x32xf32>
    %169 = arith.mulf %164, %168 : vector<17x32xf32>
    %c0_76 = arith.constant 0 : index
    %c0_77 = arith.constant 0 : index
    %c0_78 = arith.constant 0 : index
    %170 = vector.load %arg17[%c0_76, %c0_77, %c0_78] : memref<1x1x32xf32, #tpu.memory_space<vmem>>, vector<1x1x32xf32>
    %171 = vector.shape_cast %170 : vector<1x1x32xf32> to vector<1x32xf32>
    %172 = vector.broadcast %171 : vector<1x32xf32> to vector<17x32xf32>
    %173 = arith.mulf %169, %172 : vector<17x32xf32>
    %c0_79 = arith.constant 0 : index
    %c0_80 = arith.constant 0 : index
    %c0_81 = arith.constant 0 : index
    %174 = vector.load %arg18[%c0_79, %c0_80, %c0_81] : memref<1x1x32xf32, #tpu.memory_space<vmem>>, vector<1x1x32xf32>
    %175 = vector.shape_cast %174 : vector<1x1x32xf32> to vector<1x32xf32>
    %176 = vector.broadcast %175 : vector<1x32xf32> to vector<17x32xf32>
    %177 = arith.addf %173, %176 : vector<17x32xf32>
    %c0_82 = arith.constant 0 : index
    %c0_83 = arith.constant 0 : index
    %178 = vector.load %arg22[%c0_82, %c0_83] : memref<17x32xf32, #tpu.memory_space<vmem>>, vector<17x32xf32>
    tpu.vector_store %arg22[%c0_82, %c0_83], %177 {strides = array<i32>} : memref<17x32xf32, #tpu.memory_space<vmem>>, vector<17x32xf32>,
    %c1_i32 = arith.constant 1 : i32
    %179 = arith.cmpi eq, %arg1, %c1_i32 : i32
    %180 = arith.extui %179 : i1 to i32
    %c0_i32_84 = arith.constant 0 : i32
    %181 = arith.cmpi ne, %180, %c0_i32_84 : i32
    scf.if %181 {
      %182 = vector.shape_cast %177 : vector<17x32xf32> to vector<1x17x32xf32>
      %183 = vector.extract_strided_slice %182 {offsets = [0, 0, 0], sizes = [1, 1, 32], strides = [1, 1, 1]} : vector<1x17x32xf32> to vector<1x1x32xf32>
      %184 = vector.shape_cast %183 : vector<1x1x32xf32> to vector<1x32xf32>
      %cst_85 = arith.constant dense<0.000000e+00> : vector<1xf32>
      %185 = vector.multi_reduction <add>, %184, %cst_85 [1] : vector<1x32xf32> to vector<1xf32>
      %186 = vector.shape_cast %185 : vector<1xf32> to vector<1x1xf32>
      %cst_86 = arith.constant 3.200000e+01 : f32
      %187 = vector.broadcast %cst_86 : f32 to vector<1x1xf32>
      %188 = arith.divf %186, %187 : vector<1x1xf32>
      %189 = vector.broadcast %188 : vector<1x1xf32> to vector<1x32xf32>
      %190 = arith.subf %184, %189 : vector<1x32xf32>
      %191 = arith.mulf %190, %190 : vector<1x32xf32>
      %cst_87 = arith.constant dense<0.000000e+00> : vector<1xf32>
      %192 = vector.multi_reduction <add>, %191, %cst_87 [1] : vector<1x32xf32> to vector<1xf32>
      %193 = vector.shape_cast %192 : vector<1xf32> to vector<1x1xf32>
      %cst_88 = arith.constant 3.200000e+01 : f32
      %194 = vector.broadcast %cst_88 : f32 to vector<1x1xf32>
      %195 = arith.divf %193, %194 : vector<1x1xf32>
      %196 = vector.broadcast %188 : vector<1x1xf32> to vector<1x32xf32>
      %197 = arith.subf %184, %196 : vector<1x32xf32>
      %cst_89 = arith.constant 9.99999974E-6 : f32
      %198 = vector.broadcast %cst_89 : f32 to vector<1x1xf32>
      %199 = arith.addf %195, %198 : vector<1x1xf32>
      %200 = math.rsqrt %199 : vector<1x1xf32>
      %201 = vector.broadcast %200 : vector<1x1xf32> to vector<1x32xf32>
      %202 = arith.mulf %197, %201 : vector<1x32xf32>
      %c0_90 = arith.constant 0 : index
      %c0_91 = arith.constant 0 : index
      %203 = vector.load %arg19[%c0_90, %c0_91] : memref<1x32xf32, #tpu.memory_space<vmem>>, vector<1x32xf32>
      %204 = arith.mulf %202, %203 : vector<1x32xf32>
      %c0_92 = arith.constant 0 : index
      %c0_93 = arith.constant 0 : index
      %205 = vector.load %arg20[%c0_92, %c0_93] : memref<1x32xf32, #tpu.memory_space<vmem>>, vector<1x32xf32>
      %206 = arith.addf %204, %205 : vector<1x32xf32>
      %207 = vector.shape_cast %206 : vector<1x32xf32> to vector<1x1x32xf32>
      %c0_94 = arith.constant 0 : index
      %c0_95 = arith.constant 0 : index
      %c0_96 = arith.constant 0 : index
      %208 = vector.load %arg21[%c0_94, %c0_95, %c0_96] : memref<1x1x32xf32, #tpu.memory_space<vmem>>, vector<1x1x32xf32>
      tpu.vector_store %arg21[%c0_94, %c0_95, %c0_96], %207 {strides = array<i32>} : memref<1x1x32xf32, #tpu.memory_space<vmem>>, vector<1x1x32xf32>,
    } else {
    }
    return
  }
  func.func @transform_0(%arg0: i32, %arg1: i32) -> (i32, i32, i32) {
    %c0_i32 = arith.constant 0 : i32
    %c0_i32_0 = arith.constant 0 : i32
    %c0_i32_1 = arith.constant 0 : i32
    return %arg0, %c0_i32, %c0_i32_0 : i32, i32, i32
  }
  func.func @transform_1(%arg0: i32, %arg1: i32) -> (i32, i32, i32) {
    %c0_i32 = arith.constant 0 : i32
    %c0_i32_0 = arith.constant 0 : i32
    %c0_i32_1 = arith.constant 0 : i32
    return %arg1, %c0_i32, %c0_i32_0 : i32, i32, i32
  }
  func.func @transform_2(%arg0: i32, %arg1: i32) -> (i32, i32, i32) {
    %c0_i32 = arith.constant 0 : i32
    %c0_i32_0 = arith.constant 0 : i32
    %c0_i32_1 = arith.constant 0 : i32
    return %arg1, %c0_i32, %c0_i32_0 : i32, i32, i32
  }
  func.func @transform_3(%arg0: i32, %arg1: i32) -> (i32, i32, i32) {
    %c0_i32 = arith.constant 0 : i32
    %c0_i32_0 = arith.constant 0 : i32
    %c0_i32_1 = arith.constant 0 : i32
    return %arg1, %c0_i32, %c0_i32_0 : i32, i32, i32
  }
  func.func @transform_4(%arg0: i32, %arg1: i32) -> (i32, i32, i32) {
    %c0_i32 = arith.constant 0 : i32
    %c0_i32_0 = arith.constant 0 : i32
    %c0_i32_1 = arith.constant 0 : i32
    return %arg1, %c0_i32, %c0_i32_0 : i32, i32, i32
  }
  func.func @transform_5(%arg0: i32, %arg1: i32) -> (i32, i32, i32) {
    %c0_i32 = arith.constant 0 : i32
    %c0_i32_0 = arith.constant 0 : i32
    %c0_i32_1 = arith.constant 0 : i32
    return %arg1, %c0_i32, %c0_i32_0 : i32, i32, i32
  }
  func.func @transform_6(%arg0: i32, %arg1: i32) -> (i32, i32, i32) {
    %c0_i32 = arith.constant 0 : i32
    %c0_i32_0 = arith.constant 0 : i32
    %c0_i32_1 = arith.constant 0 : i32
    return %arg1, %c0_i32, %c0_i32_0 : i32, i32, i32
  }
  func.func @transform_7(%arg0: i32, %arg1: i32) -> (i32, i32, i32) {
    %c0_i32 = arith.constant 0 : i32
    %c0_i32_0 = arith.constant 0 : i32
    %c0_i32_1 = arith.constant 0 : i32
    return %arg1, %c0_i32, %c0_i32_0 : i32, i32, i32
  }
  func.func @transform_8(%arg0: i32, %arg1: i32) -> (i32, i32, i32) {
    %c0_i32 = arith.constant 0 : i32
    %c0_i32_0 = arith.constant 0 : i32
    %c0_i32_1 = arith.constant 0 : i32
    return %arg1, %c0_i32, %c0_i32_0 : i32, i32, i32
  }
  func.func @transform_9(%arg0: i32, %arg1: i32) -> (i32, i32, i32) {
    %c0_i32 = arith.constant 0 : i32
    %c0_i32_0 = arith.constant 0 : i32
    %c0_i32_1 = arith.constant 0 : i32
    return %arg1, %c0_i32, %c0_i32_0 : i32, i32, i32
  }
  func.func @transform_10(%arg0: i32, %arg1: i32) -> (i32, i32, i32) {
    %c0_i32 = arith.constant 0 : i32
    %c0_i32_0 = arith.constant 0 : i32
    %c0_i32_1 = arith.constant 0 : i32
    return %arg1, %c0_i32, %c0_i32_0 : i32, i32, i32
  }
  func.func @transform_11(%arg0: i32, %arg1: i32) -> (i32, i32, i32) {
    %c0_i32 = arith.constant 0 : i32
    %c0_i32_0 = arith.constant 0 : i32
    %c0_i32_1 = arith.constant 0 : i32
    return %arg1, %c0_i32, %c0_i32_0 : i32, i32, i32
  }
  func.func @transform_12(%arg0: i32, %arg1: i32) -> (i32, i32, i32) {
    %c0_i32 = arith.constant 0 : i32
    %c0_i32_0 = arith.constant 0 : i32
    %c0_i32_1 = arith.constant 0 : i32
    return %arg1, %c0_i32, %c0_i32_0 : i32, i32, i32
  }
  func.func @transform_13(%arg0: i32, %arg1: i32) -> (i32, i32, i32) {
    %c0_i32 = arith.constant 0 : i32
    %c0_i32_0 = arith.constant 0 : i32
    %c0_i32_1 = arith.constant 0 : i32
    return %arg1, %c0_i32, %c0_i32_0 : i32, i32, i32
  }
  func.func @transform_14(%arg0: i32, %arg1: i32) -> (i32, i32, i32) {
    %c0_i32 = arith.constant 0 : i32
    %c0_i32_0 = arith.constant 0 : i32
    %c0_i32_1 = arith.constant 0 : i32
    return %arg1, %c0_i32, %c0_i32_0 : i32, i32, i32
  }
  func.func @transform_15(%arg0: i32, %arg1: i32) -> (i32, i32, i32) {
    %c0_i32 = arith.constant 0 : i32
    %c0_i32_0 = arith.constant 0 : i32
    %c0_i32_1 = arith.constant 0 : i32
    return %arg1, %c0_i32, %c0_i32_0 : i32, i32, i32
  }
  func.func @transform_16(%arg0: i32, %arg1: i32) -> (i32, i32, i32) {
    %c0_i32 = arith.constant 0 : i32
    %c0_i32_0 = arith.constant 0 : i32
    %c0_i32_1 = arith.constant 0 : i32
    return %arg1, %c0_i32, %c0_i32_0 : i32, i32, i32
  }
  func.func @transform_17(%arg0: i32, %arg1: i32) -> (i32, i32) {
    %c0_i32 = arith.constant 0 : i32
    %c0_i32_0 = arith.constant 0 : i32
    %c0_i32_1 = arith.constant 0 : i32
    return %c0_i32, %c0_i32_0 : i32, i32
  }
  func.func @transform_18(%arg0: i32, %arg1: i32) -> (i32, i32) {
    %c0_i32 = arith.constant 0 : i32
    %c0_i32_0 = arith.constant 0 : i32
    %c0_i32_1 = arith.constant 0 : i32
    return %c0_i32, %c0_i32_0 : i32, i32
  }
  func.func @transform_19(%arg0: i32, %arg1: i32) -> (i32, i32, i32) {
    %c0_i32 = arith.constant 0 : i32
    %c0_i32_0 = arith.constant 0 : i32
    %c0_i32_1 = arith.constant 0 : i32
    return %arg0, %c0_i32, %c0_i32_0 : i32, i32, i32
  }
}

</mosaic_0001>

<llo_original>
// kernel: tpu_custom_call.1
$region0: #{tpu_custom_call.1}
  #allocation0 [shape = 'u32[]', space=smem, size = 0x4, offset = 0x4, fixed_abs, tag = 'smem constant byte address 0x4 - core index']
  #allocation1 [shape = 'u32[144,128]{1,0:T(1,128)}', space=vmem, size = 0x12000, scoped, tag = 'internal scratch']
  #allocation2 [shape = 'f32[17,32]{1,0:T(8,128)}', space=vmem, size = 0x3000, scoped, tag = 'scratch operand']
  %s0 = inlined_call_operand.vmem [shape: f32[2,17,32], index: 0, kind: input, shape index: {}]
  %s1 = inlined_call_operand.vmem [shape: bf16[2,32,32], index: 1, kind: input, shape index: {}]
  %s2 = inlined_call_operand.vmem [shape: bf16[2,32,32], index: 2, kind: input, shape index: {}]
  %s3 = inlined_call_operand.vmem [shape: bf16[2,32,32], index: 3, kind: input, shape index: {}]
  %s4 = inlined_call_operand.hbm [shape: f32[2,1,32], index: 4, kind: input, shape index: {}]
  %s5 = inlined_call_operand.vmem [shape: f32[2,1,32], index: 5, kind: input, shape index: {}]
  %s6 = inlined_call_operand.vmem [shape: f32[2,1,32], index: 6, kind: input, shape index: {}]
  %s7 = inlined_call_operand.vmem [shape: bf16[2,32,32], index: 7, kind: input, shape index: {}]
  %s8 = inlined_call_operand.vmem [shape: f32[2,1,32], index: 8, kind: input, shape index: {}]
  %s9 = inlined_call_operand.vmem [shape: f32[2,1,32], index: 9, kind: input, shape index: {}]
  %s10 = inlined_call_operand.vmem [shape: f32[2,1,32], index: 10, kind: input, shape index: {}]
  %s11 = inlined_call_operand.vmem [shape: bf16[2,32,64], index: 11, kind: input, shape index: {}]
  %s12 = inlined_call_operand.vmem [shape: f32[2,1,64], index: 12, kind: input, shape index: {}]
  %s13 = inlined_call_operand.vmem [shape: bf16[2,64,32], index: 13, kind: input, shape index: {}]
  %s14 = inlined_call_operand.vmem [shape: f32[2,1,32], index: 14, kind: input, shape index: {}]
  %s15 = inlined_call_operand.vmem [shape: f32[2,1,32], index: 15, kind: input, shape index: {}]
  %s16 = inlined_call_operand.vmem [shape: f32[2,1,32], index: 16, kind: input, shape index: {}]
  %s17 = inlined_call_operand.vmem [shape: f32[1,32], index: 17, kind: input, shape index: {}]
  %s18 = inlined_call_operand.vmem [shape: f32[1,32], index: 18, kind: input, shape index: {}]
  %s19 = inlined_call_operand.hbm [shape: f32[2,1,32], index: 19, kind: output, shape index: {}]
  %s20 = sld [smem:[#allocation0]]
  $region121: #{tpu_custom_call.1} parent=0
    _
  %s22 = ssub.s32 1, %s20
  %s23 = scalar_select 0, %s22, %s20
  $region1: #{tpu_custom_call.1} parent=0
    #allocation3 [shape = 'u8[1024]{0}', space=vmem, size = 0x400, scoped, tag = 'input window, operand 4']
    #allocation4 [shape = 's32[2]{0}', space=sflag, size = 0x8, scoped, tag = 'scoped memory for tpu_custom_call.1']
    #allocation5 [shape = 's32[2]{0}', space=sflag, size = 0x8, scoped, tag = 'scoped memory for tpu_custom_call.1']
    #allocation6 [shape = 'u8[1024]{0}', space=vmem, size = 0x400, scoped, tag = 'output window, operand 0']
    %24 = vsyncpa [#allocation4], 0
    %s25 = scalar_lea.sflag [#allocation4], 1
    %26 = vsyncpa %s25, 0
    %27 = vsyncpa [#allocation5], 0
    %s28 = scalar_lea.sflag [#allocation5], 1
    %29 = vsyncpa %s28, 0
    loop: start=0, step=1, limit=6
    $region2: #{tpu_custom_call.1} parent=1 // loop_pre_header
      _
    $region3: #{tpu_custom_call.1} parent=1 // loop_header
      %s31 = sphi 0, %s35
      %p32 = scmp.ge.s32.totalorder %s31, 6
      %s38 = sphi 0, %s50
      %s39 = sphi 0, %s46
      %s40 = sphi 0, %s38
      %s41 = sphi 0, %s39
      %s42 = sphi 0, %s40
      %s43 = sphi 0, %s41
      %s53 = sphi 0, %s55
      %s56 = sphi 0, %s53
      %s57 = sphi 0, %s56
      %s73 = sphi 0, %s57
      %s79 = sphi 0, %s81
      %s82 = sphi 0, %s79
      %s83 = sphi 0, %s82
      %s99 = sphi 0, %s83
      %s105 = sphi 0, %s107
      %s108 = sphi 0, %s105
      %s109 = sphi 0, %s108
      %s125 = sphi 0, %s109
      %s131 = sphi 0, %s133
      %s134 = sphi 0, %s131
      %s135 = sphi 0, %s134
      %s151 = sphi 0, %s135
      %s157 = sphi 0, %s159
      %s160 = sphi 0, %s157
      %s161 = sphi 0, %s160
      %s177 = sphi 0, %s161
      %s183 = sphi 0, %s185
      %s186 = sphi 0, %s183
      %s187 = sphi 0, %s186
      %s203 = sphi 0, %s187
      %s209 = sphi 0, %s211
      %s212 = sphi 0, %s209
      %s213 = sphi 0, %s212
      %s229 = sphi 0, %s213
      %s235 = sphi 0, %s237
      %s238 = sphi 0, %s235
      %s239 = sphi 0, %s238
      %s255 = sphi 0, %s239
      %s261 = sphi 0, %s263
      %s264 = sphi 0, %s261
      %s265 = sphi 0, %s264
      %s281 = sphi 0, %s265
      %s287 = sphi 0, %s289
      %s290 = sphi 0, %s287
      %s291 = sphi 0, %s290
      %s307 = sphi 0, %s291
      %s313 = sphi 0, %s315
      %s316 = sphi 0, %s313
      %s317 = sphi 0, %s316
      %s333 = sphi 0, %s317
      %s339 = sphi 0, %s341
      %s342 = sphi 0, %s339
      %s343 = sphi 0, %s342
      %s359 = sphi 0, %s343
      %s365 = sphi 0, %s367
      %s368 = sphi 0, %s365
      %s369 = sphi 0, %s368
      %s385 = sphi 0, %s369
      %s391 = sphi 0, %s393
      %s394 = sphi 0, %s391
      %s395 = sphi 0, %s394
      %s411 = sphi 0, %s395
      %s417 = sphi 0, %s419
      %s420 = sphi 0, %s417
      %s421 = sphi 0, %s420
      %s437 = sphi 0, %s421
      %s443 = sphi 0, %s445
      %s446 = sphi 0, %s443
      %s447 = sphi 0, %s446
      %s463 = sphi 0, %s447
      %s469 = sphi 0, %s471
      %s472 = sphi 0, %s469
      %s473 = sphi 0, %s472
      %s489 = sphi 0, %s473
      %s493 = sphi 0, %s493
      %s495 = sphi 0, %s493
      %s496 = sphi 0, %s495
      %s510 = sphi 0, %s496
      %s514 = sphi 0, %s514
      %s516 = sphi 0, %s514
      %s517 = sphi 0, %s516
      %s531 = sphi 0, %s517
      %s537 = sphi 0, %s539
      %s540 = sphi 0, %s537
      %s541 = sphi 0, %s540
      %s557 = sphi 0, %s541
    $region4: #{tpu_custom_call.1} parent=1 // loop_header_branch
      %34 = sbr.rel (%p32) target = $region8
    $region5: #{tpu_custom_call.1} parent=1 // loop_body
      %s36 = ssub.s32 %s31, 1
      %s37 = ssub.s32 %s31, 2
      %s44 = sadd.s32 1, %s39
      %p45 = scmp.ge.s32.totalorder %s44, 2
      %s46 = scalar_select %p45, 0, %s44
      %s47 = sadd.s32 1, %s38
      %s48 = scalar_select %p45, %s47, %s38
      %p49 = scmp.ge.s32.totalorder %s48, 2
      %s50 = scalar_select %p49, 0, %s48
      %s51 = ssub.s32 %s38, %s50
      %p52 = scmp.eq.s32.totalorder %s51, 0
      %s54 = sadd.s32 %s53, 1
      %s55 = scalar_select %p52, %s53, %s54
      %p58 = pneg %p52
      %p59 = scmp.eq.s32.totalorder %s31, 3
      %p60 = por %p58, %p59
      %p61 = scmp.ne.s32.totalorder %s53, %s56
      %p62 = scmp.eq.s32.totalorder %s31, 0
      %p63 = por %p61, %p62
      %p64 = scmp.ne.s32.totalorder %s53, %s56
      %p65 = scmp.eq.s32.totalorder %s36, 3
      %p66 = por %p64, %p65
      %p67 = scmp.ne.s32.totalorder %s56, %s57
      %p68 = scmp.eq.s32.totalorder %s36, 0
      %p69 = por %p67, %p68
      %p70 = scmp.ne.s32.totalorder %s56, %s57
      %p71 = scmp.eq.s32.totalorder %s37, 3
      %p72 = por %p70, %p71
      %p74 = scmp.ne.s32.totalorder %s57, %s73
      %p75 = scmp.eq.s32.totalorder %s37, 0
      %p76 = por %p74, %p75
      %s77 = ssub.s32 %s39, %s46
      %p78 = scmp.eq.s32.totalorder %s77, 0
      %s80 = sadd.s32 %s79, 1
      %s81 = scalar_select %p78, %s79, %s80
      %p84 = pneg %p78
      %p85 = scmp.eq.s32.totalorder %s31, 3
      %p86 = por %p84, %p85
      %p87 = scmp.ne.s32.totalorder %s79, %s82
      %p88 = scmp.eq.s32.totalorder %s31, 0
      %p89 = por %p87, %p88
      %p90 = scmp.ne.s32.totalorder %s79, %s82
      %p91 = scmp.eq.s32.totalorder %s36, 3
      %p92 = por %p90, %p91
      %p93 = scmp.ne.s32.totalorder %s82, %s83
      %p94 = scmp.eq.s32.totalorder %s36, 0
      %p95 = por %p93, %p94
      %p96 = scmp.ne.s32.totalorder %s82, %s83
      %p97 = scmp.eq.s32.totalorder %s37, 3
      %p98 = por %p96, %p97
      %p100 = scmp.ne.s32.totalorder %s83, %s99
      %p101 = scmp.eq.s32.totalorder %s37, 0
      %p102 = por %p100, %p101
      %s103 = ssub.s32 %s39, %s46
      %p104 = scmp.eq.s32.totalorder %s103, 0
      %s106 = sadd.s32 %s105, 1
      %s107 = scalar_select %p104, %s105, %s106
      %p110 = pneg %p104
      %p111 = scmp.eq.s32.totalorder %s31, 3
      %p112 = por %p110, %p111
      %p113 = scmp.ne.s32.totalorder %s105, %s108
      %p114 = scmp.eq.s32.totalorder %s31, 0
      %p115 = por %p113, %p114
      %p116 = scmp.ne.s32.totalorder %s105, %s108
      %p117 = scmp.eq.s32.totalorder %s36, 3
      %p118 = por %p116, %p117
      %p119 = scmp.ne.s32.totalorder %s108, %s109
      %p120 = scmp.eq.s32.totalorder %s36, 0
      %p121 = por %p119, %p120
      %p122 = scmp.ne.s32.totalorder %s108, %s109
      %p123 = scmp.eq.s32.totalorder %s37, 3
      %p124 = por %p122, %p123
      %p126 = scmp.ne.s32.totalorder %s109, %s125
      %p127 = scmp.eq.s32.totalorder %s37, 0
      %p128 = por %p126, %p127
      %s129 = ssub.s32 %s39, %s46
      %p130 = scmp.eq.s32.totalorder %s129, 0
      %s132 = sadd.s32 %s131, 1
      %s133 = scalar_select %p130, %s131, %s132
      %p136 = pneg %p130
      %p137 = scmp.eq.s32.totalorder %s31, 3
      %p138 = por %p136, %p137
      %p139 = scmp.ne.s32.totalorder %s131, %s134
      %p140 = scmp.eq.s32.totalorder %s31, 0
      %p141 = por %p139, %p140
      %p142 = scmp.ne.s32.totalorder %s131, %s134
      %p143 = scmp.eq.s32.totalorder %s36, 3
      %p144 = por %p142, %p143
      %p145 = scmp.ne.s32.totalorder %s134, %s135
      %p146 = scmp.eq.s32.totalorder %s36, 0
      %p147 = por %p145, %p146
      %p148 = scmp.ne.s32.totalorder %s134, %s135
      %p149 = scmp.eq.s32.totalorder %s37, 3
      %p150 = por %p148, %p149
      %p152 = scmp.ne.s32.totalorder %s135, %s151
      %p153 = scmp.eq.s32.totalorder %s37, 0
      %p154 = por %p152, %p153
      %s155 = ssub.s32 %s39, %s46
      %p156 = scmp.eq.s32.totalorder %s155, 0
      %s158 = sadd.s32 %s157, 1
      %s159 = scalar_select %p156, %s157, %s158
      %p162 = pneg %p156
      %p163 = scmp.eq.s32.totalorder %s31, 3
      %p164 = por %p162, %p163
      %p165 = scmp.ne.s32.totalorder %s157, %s160
      %p166 = scmp.eq.s32.totalorder %s31, 0
      %p167 = por %p165, %p166
      %p168 = scmp.ne.s32.totalorder %s157, %s160
      %p169 = scmp.eq.s32.totalorder %s36, 3
      %p170 = por %p168, %p169
      %p171 = scmp.ne.s32.totalorder %s160, %s161
      %p172 = scmp.eq.s32.totalorder %s36, 0
      %p173 = por %p171, %p172
      %p174 = scmp.ne.s32.totalorder %s160, %s161
      %p175 = scmp.eq.s32.totalorder %s37, 3
      %p176 = por %p174, %p175
      %p178 = scmp.ne.s32.totalorder %s161, %s177
      %p179 = scmp.eq.s32.totalorder %s37, 0
      %p180 = por %p178, %p179
      %s181 = ssub.s32 %s39, %s46
      %p182 = scmp.eq.s32.totalorder %s181, 0
      %s184 = sadd.s32 %s183, 1
      %s185 = scalar_select %p182, %s183, %s184
      %p188 = pneg %p182
      %p189 = scmp.eq.s32.totalorder %s31, 3
      %p190 = por %p188, %p189
      %p191 = scmp.ne.s32.totalorder %s183, %s186
      %p192 = scmp.eq.s32.totalorder %s31, 0
      %p193 = por %p191, %p192
      %p194 = scmp.ne.s32.totalorder %s183, %s186
      %p195 = scmp.eq.s32.totalorder %s36, 3
      %p196 = por %p194, %p195
      %p197 = scmp.ne.s32.totalorder %s186, %s187
      %p198 = scmp.eq.s32.totalorder %s36, 0
      %p199 = por %p197, %p198
      %p200 = scmp.ne.s32.totalorder %s186, %s187
      %p201 = scmp.eq.s32.totalorder %s37, 3
      %p202 = por %p200, %p201
      %p204 = scmp.ne.s32.totalorder %s187, %s203
      %p205 = scmp.eq.s32.totalorder %s37, 0
      %p206 = por %p204, %p205
      %s207 = ssub.s32 %s39, %s46
      %p208 = scmp.eq.s32.totalorder %s207, 0
      %s210 = sadd.s32 %s209, 1
      %s211 = scalar_select %p208, %s209, %s210
      %p214 = pneg %p208
      %p215 = scmp.eq.s32.totalorder %s31, 3
      %p216 = por %p214, %p215
      %p217 = scmp.ne.s32.totalorder %s209, %s212
      %p218 = scmp.eq.s32.totalorder %s31, 0
      %p219 = por %p217, %p218
      %p220 = scmp.ne.s32.totalorder %s209, %s212
      %p221 = scmp.eq.s32.totalorder %s36, 3
      %p222 = por %p220, %p221
      %p223 = scmp.ne.s32.totalorder %s212, %s213
      %p224 = scmp.eq.s32.totalorder %s36, 0
      %p225 = por %p223, %p224
      %p226 = scmp.ne.s32.totalorder %s212, %s213
      %p227 = scmp.eq.s32.totalorder %s37, 3
      %p228 = por %p226, %p227
      %p230 = scmp.ne.s32.totalorder %s213, %s229
      %p231 = scmp.eq.s32.totalorder %s37, 0
      %p232 = por %p230, %p231
      %s233 = ssub.s32 %s39, %s46
      %p234 = scmp.eq.s32.totalorder %s233, 0
      %s236 = sadd.s32 %s235, 1
      %s237 = scalar_select %p234, %s235, %s236
      %p240 = pneg %p234
      %p241 = scmp.eq.s32.totalorder %s31, 3
      %p242 = por %p240, %p241
      %p243 = scmp.ne.s32.totalorder %s235, %s238
      %p244 = scmp.eq.s32.totalorder %s31, 0
      %p245 = por %p243, %p244
      %p246 = scmp.ne.s32.totalorder %s235, %s238
      %p247 = scmp.eq.s32.totalorder %s36, 3
      %p248 = por %p246, %p247
      %p249 = scmp.ne.s32.totalorder %s238, %s239
      %p250 = scmp.eq.s32.totalorder %s36, 0
      %p251 = por %p249, %p250
      %p252 = scmp.ne.s32.totalorder %s238, %s239
      %p253 = scmp.eq.s32.totalorder %s37, 3
      %p254 = por %p252, %p253
      %p256 = scmp.ne.s32.totalorder %s239, %s255
      %p257 = scmp.eq.s32.totalorder %s37, 0
      %p258 = por %p256, %p257
      %s259 = ssub.s32 %s39, %s46
      %p260 = scmp.eq.s32.totalorder %s259, 0
      %s262 = sadd.s32 %s261, 1
      %s263 = scalar_select %p260, %s261, %s262
      %p266 = pneg %p260
      %p267 = scmp.eq.s32.totalorder %s31, 3
      %p268 = por %p266, %p267
      %p269 = scmp.ne.s32.totalorder %s261, %s264
      %p270 = scmp.eq.s32.totalorder %s31, 0
      %p271 = por %p269, %p270
      %p272 = scmp.ne.s32.totalorder %s261, %s264
      %p273 = scmp.eq.s32.totalorder %s36, 3
      %p274 = por %p272, %p273
      %p275 = scmp.ne.s32.totalorder %s264, %s265
      %p276 = scmp.eq.s32.totalorder %s36, 0
      %p277 = por %p275, %p276
      %p278 = scmp.ne.s32.totalorder %s264, %s265
      %p279 = scmp.eq.s32.totalorder %s37, 3
      %p280 = por %p278, %p279
      %p282 = scmp.ne.s32.totalorder %s265, %s281
      %p283 = scmp.eq.s32.totalorder %s37, 0
      %p284 = por %p282, %p283
      %s285 = ssub.s32 %s39, %s46
      %p286 = scmp.eq.s32.totalorder %s285, 0
      %s288 = sadd.s32 %s287, 1
      %s289 = scalar_select %p286, %s287, %s288
      %p292 = pneg %p286
      %p293 = scmp.eq.s32.totalorder %s31, 3
      %p294 = por %p292, %p293
      %p295 = scmp.ne.s32.totalorder %s287, %s290
      %p296 = scmp.eq.s32.totalorder %s31, 0
      %p297 = por %p295, %p296
      %p298 = scmp.ne.s32.totalorder %s287, %s290
      %p299 = scmp.eq.s32.totalorder %s36, 3
      %p300 = por %p298, %p299
      %p301 = scmp.ne.s32.totalorder %s290, %s291
      %p302 = scmp.eq.s32.totalorder %s36, 0
      %p303 = por %p301, %p302
      %p304 = scmp.ne.s32.totalorder %s290, %s291
      %p305 = scmp.eq.s32.totalorder %s37, 3
      %p306 = por %p304, %p305
      %p308 = scmp.ne.s32.totalorder %s291, %s307
      %p309 = scmp.eq.s32.totalorder %s37, 0
      %p310 = por %p308, %p309
      %s311 = ssub.s32 %s39, %s46
      %p312 = scmp.eq.s32.totalorder %s311, 0
      %s314 = sadd.s32 %s313, 1
      %s315 = scalar_select %p312, %s313, %s314
      %p318 = pneg %p312
      %p319 = scmp.eq.s32.totalorder %s31, 3
      %p320 = por %p318, %p319
      %p321 = scmp.ne.s32.totalorder %s313, %s316
      %p322 = scmp.eq.s32.totalorder %s31, 0
      %p323 = por %p321, %p322
      %p324 = scmp.ne.s32.totalorder %s313, %s316
      %p325 = scmp.eq.s32.totalorder %s36, 3
      %p326 = por %p324, %p325
      %p327 = scmp.ne.s32.totalorder %s316, %s317
      %p328 = scmp.eq.s32.totalorder %s36, 0
      %p329 = por %p327, %p328
      %p330 = scmp.ne.s32.totalorder %s316, %s317
      %p331 = scmp.eq.s32.totalorder %s37, 3
      %p332 = por %p330, %p331
      %p334 = scmp.ne.s32.totalorder %s317, %s333
      %p335 = scmp.eq.s32.totalorder %s37, 0
      %p336 = por %p334, %p335
      %s337 = ssub.s32 %s39, %s46
      %p338 = scmp.eq.s32.totalorder %s337, 0
      %s340 = sadd.s32 %s339, 1
      %s341 = scalar_select %p338, %s339, %s340
      %p344 = pneg %p338
      %p345 = scmp.eq.s32.totalorder %s31, 3
      %p346 = por %p344, %p345
      %p347 = scmp.ne.s32.totalorder %s339, %s342
      %p348 = scmp.eq.s32.totalorder %s31, 0
      %p349 = por %p347, %p348
      %p350 = scmp.ne.s32.totalorder %s339, %s342
      %p351 = scmp.eq.s32.totalorder %s36, 3
      %p352 = por %p350, %p351
      %p353 = scmp.ne.s32.totalorder %s342, %s343
      %p354 = scmp.eq.s32.totalorder %s36, 0
      %p355 = por %p353, %p354
      %p356 = scmp.ne.s32.totalorder %s342, %s343
      %p357 = scmp.eq.s32.totalorder %s37, 3
      %p358 = por %p356, %p357
      %p360 = scmp.ne.s32.totalorder %s343, %s359
      %p361 = scmp.eq.s32.totalorder %s37, 0
      %p362 = por %p360, %p361
      %s363 = ssub.s32 %s39, %s46
      %p364 = scmp.eq.s32.totalorder %s363, 0
      %s366 = sadd.s32 %s365, 1
      %s367 = scalar_select %p364, %s365, %s366
      %p370 = pneg %p364
      %p371 = scmp.eq.s32.totalorder %s31, 3
      %p372 = por %p370, %p371
      %p373 = scmp.ne.s32.totalorder %s365, %s368
      %p374 = scmp.eq.s32.totalorder %s31, 0
      %p375 = por %p373, %p374
      %p376 = scmp.ne.s32.totalorder %s365, %s368
      %p377 = scmp.eq.s32.totalorder %s36, 3
      %p378 = por %p376, %p377
      %p379 = scmp.ne.s32.totalorder %s368, %s369
      %p380 = scmp.eq.s32.totalorder %s36, 0
      %p381 = por %p379, %p380
      %p382 = scmp.ne.s32.totalorder %s368, %s369
      %p383 = scmp.eq.s32.totalorder %s37, 3
      %p384 = por %p382, %p383
      %p386 = scmp.ne.s32.totalorder %s369, %s385
      %p387 = scmp.eq.s32.totalorder %s37, 0
      %p388 = por %p386, %p387
      %s389 = ssub.s32 %s39, %s46
      %p390 = scmp.eq.s32.totalorder %s389, 0
      %s392 = sadd.s32 %s391, 1
      %s393 = scalar_select %p390, %s391, %s392
      %p396 = pneg %p390
      %p397 = scmp.eq.s32.totalorder %s31, 3
      %p398 = por %p396, %p397
      %p399 = scmp.ne.s32.totalorder %s391, %s394
      %p400 = scmp.eq.s32.totalorder %s31, 0
      %p401 = por %p399, %p400
      %p402 = scmp.ne.s32.totalorder %s391, %s394
      %p403 = scmp.eq.s32.totalorder %s36, 3
      %p404 = por %p402, %p403
      %p405 = scmp.ne.s32.totalorder %s394, %s395
      %p406 = scmp.eq.s32.totalorder %s36, 0
      %p407 = por %p405, %p406
      %p408 = scmp.ne.s32.totalorder %s394, %s395
      %p409 = scmp.eq.s32.totalorder %s37, 3
      %p410 = por %p408, %p409
      %p412 = scmp.ne.s32.totalorder %s395, %s411
      %p413 = scmp.eq.s32.totalorder %s37, 0
      %p414 = por %p412, %p413
      %s415 = ssub.s32 %s39, %s46
      %p416 = scmp.eq.s32.totalorder %s415, 0
      %s418 = sadd.s32 %s417, 1
      %s419 = scalar_select %p416, %s417, %s418
      %p422 = pneg %p416
      %p423 = scmp.eq.s32.totalorder %s31, 3
      %p424 = por %p422, %p423
      %p425 = scmp.ne.s32.totalorder %s417, %s420
      %p426 = scmp.eq.s32.totalorder %s31, 0
      %p427 = por %p425, %p426
      %p428 = scmp.ne.s32.totalorder %s417, %s420
      %p429 = scmp.eq.s32.totalorder %s36, 3
      %p430 = por %p428, %p429
      %p431 = scmp.ne.s32.totalorder %s420, %s421
      %p432 = scmp.eq.s32.totalorder %s36, 0
      %p433 = por %p431, %p432
      %p434 = scmp.ne.s32.totalorder %s420, %s421
      %p435 = scmp.eq.s32.totalorder %s37, 3
      %p436 = por %p434, %p435
      %p438 = scmp.ne.s32.totalorder %s421, %s437
      %p439 = scmp.eq.s32.totalorder %s37, 0
      %p440 = por %p438, %p439
      %s441 = ssub.s32 %s39, %s46
      %p442 = scmp.eq.s32.totalorder %s441, 0
      %s444 = sadd.s32 %s443, 1
      %s445 = scalar_select %p442, %s443, %s444
      %p448 = pneg %p442
      %p449 = scmp.eq.s32.totalorder %s31, 3
      %p450 = por %p448, %p449
      %p451 = scmp.ne.s32.totalorder %s443, %s446
      %p452 = scmp.eq.s32.totalorder %s31, 0
      %p453 = por %p451, %p452
      %p454 = scmp.ne.s32.totalorder %s443, %s446
      %p455 = scmp.eq.s32.totalorder %s36, 3
      %p456 = por %p454, %p455
      %p457 = scmp.ne.s32.totalorder %s446, %s447
      %p458 = scmp.eq.s32.totalorder %s36, 0
      %p459 = por %p457, %p458
      %p460 = scmp.ne.s32.totalorder %s446, %s447
      %p461 = scmp.eq.s32.totalorder %s37, 3
      %p462 = por %p460, %p461
      %p464 = scmp.ne.s32.totalorder %s447, %s463
      %p465 = scmp.eq.s32.totalorder %s37, 0
      %p466 = por %p464, %p465
      %s467 = ssub.s32 %s39, %s46
      %p468 = scmp.eq.s32.totalorder %s467, 0
      %s470 = sadd.s32 %s469, 1
      %s471 = scalar_select %p468, %s469, %s470
      %p474 = pneg %p468
      %p475 = scmp.eq.s32.totalorder %s31, 3
      %p476 = por %p474, %p475
      %p477 = scmp.ne.s32.totalorder %s469, %s472
      %p478 = scmp.eq.s32.totalorder %s31, 0
      %p479 = por %p477, %p478
      %p480 = scmp.ne.s32.totalorder %s469, %s472
      %p481 = scmp.eq.s32.totalorder %s36, 3
      %p482 = por %p480, %p481
      %p483 = scmp.ne.s32.totalorder %s472, %s473
      %p484 = scmp.eq.s32.totalorder %s36, 0
      %p485 = por %p483, %p484
      %p486 = scmp.ne.s32.totalorder %s472, %s473
      %p487 = scmp.eq.s32.totalorder %s37, 3
      %p488 = por %p486, %p487
      %p490 = scmp.ne.s32.totalorder %s473, %s489
      %p491 = scmp.eq.s32.totalorder %s37, 0
      %p492 = por %p490, %p491
      %s494 = sadd.s32 %s493, 1
      %p497 = scmp.eq.s32.totalorder %s31, 3
      %p498 = scmp.ne.s32.totalorder %s493, %s495
      %p499 = scmp.eq.s32.totalorder %s31, 0
      %p500 = por %p498, %p499
      %p501 = scmp.ne.s32.totalorder %s493, %s495
      %p502 = scmp.eq.s32.totalorder %s36, 3
      %p503 = por %p501, %p502
      %p504 = scmp.ne.s32.totalorder %s495, %s496
      %p505 = scmp.eq.s32.totalorder %s36, 0
      %p506 = por %p504, %p505
      %p507 = scmp.ne.s32.totalorder %s495, %s496
      %p508 = scmp.eq.s32.totalorder %s37, 3
      %p509 = por %p507, %p508
      %p511 = scmp.ne.s32.totalorder %s496, %s510
      %p512 = scmp.eq.s32.totalorder %s37, 0
      %p513 = por %p511, %p512
      %s515 = sadd.s32 %s514, 1
      %p518 = scmp.eq.s32.totalorder %s31, 3
      %p519 = scmp.ne.s32.totalorder %s514, %s516
      %p520 = scmp.eq.s32.totalorder %s31, 0
      %p521 = por %p519, %p520
      %p522 = scmp.ne.s32.totalorder %s514, %s516
      %p523 = scmp.eq.s32.totalorder %s36, 3
      %p524 = por %p522, %p523
      %p525 = scmp.ne.s32.totalorder %s516, %s517
      %p526 = scmp.eq.s32.totalorder %s36, 0
      %p527 = por %p525, %p526
      %p528 = scmp.ne.s32.totalorder %s516, %s517
      %p529 = scmp.eq.s32.totalorder %s37, 3
      %p530 = por %p528, %p529
      %p532 = scmp.ne.s32.totalorder %s517, %s531
      %p533 = scmp.eq.s32.totalorder %s37, 0
      %p534 = por %p532, %p533
      %s535 = ssub.s32 %s38, %s50
      %p536 = scmp.eq.s32.totalorder %s535, 0
      %s538 = sadd.s32 %s537, 1
      %s539 = scalar_select %p536, %s537, %s538
      %p542 = pneg %p536
      %p543 = scmp.eq.s32.totalorder %s31, 3
      %p544 = por %p542, %p543
      %p545 = scmp.ne.s32.totalorder %s537, %s540
      %p546 = scmp.eq.s32.totalorder %s31, 0
      %p547 = por %p545, %p546
      %p548 = scmp.ne.s32.totalorder %s537, %s540
      %p549 = scmp.eq.s32.totalorder %s36, 3
      %p550 = por %p548, %p549
      %p551 = scmp.ne.s32.totalorder %s540, %s541
      %p552 = scmp.eq.s32.totalorder %s36, 0
      %p553 = por %p551, %p552
      %p554 = scmp.ne.s32.totalorder %s540, %s541
      %p555 = scmp.eq.s32.totalorder %s37, 3
      %p556 = por %p554, %p555
      %p558 = scmp.ne.s32.totalorder %s541, %s557
      %p559 = scmp.eq.s32.totalorder %s37, 0
      %p560 = por %p558, %p559
      %p561 = scmp.le.s32.totalorder 1, %s31
      %p562 = scmp.lt.s32.totalorder %s31, 5
      %p563 = pnand %p561, %p562
      %p564 = pneg %p563
      // Predicated region
      $region9: #{tpu_custom_call.1} parent=5 // pred_check
        _
      $region10: #{tpu_custom_call.1} parent=5 // pred_check_branch
        %566 = sbr.rel (%p563) target = $region12
      $region11: #{tpu_custom_call.1} parent=5 // pred_region
        %s567 = ssub.s32 %s31, 1
        // Predicated region
        $region13: #{tpu_custom_call.1} parent=11 // pred_check
          %p568 = pneg %p506
        $region14: #{tpu_custom_call.1} parent=11 // pred_check_branch
          %570 = sbr.rel (%p568) target = $region16
        $region15: #{tpu_custom_call.1} parent=11 // pred_region
          _
        $region16: #{tpu_custom_call.1} parent=11 // pred_fallthru
          _
        // Predicated region
        $region17: #{tpu_custom_call.1} parent=11 // pred_check
          %p571 = pneg %p527
        $region18: #{tpu_custom_call.1} parent=11 // pred_check_branch
          %573 = sbr.rel (%p571) target = $region20
        $region19: #{tpu_custom_call.1} parent=11 // pred_region
          _
        $region20: #{tpu_custom_call.1} parent=11 // pred_fallthru
          _
      $region12: #{tpu_custom_call.1} parent=5 // pred_fallthru
        _
      %p574 = scmp.lt.s32.totalorder %s31, 4
      // Predicated region
      $region21: #{tpu_custom_call.1} parent=5 // pred_check
        %p575 = pneg %p574
      $region22: #{tpu_custom_call.1} parent=5 // pred_check_branch
        %577 = sbr.rel (%p575) target = $region24
      $region23: #{tpu_custom_call.1} parent=5 // pred_region
        // Predicated region
        $region25: #{tpu_custom_call.1} parent=23 // pred_check
          %p578 = pneg %p63
        $region26: #{tpu_custom_call.1} parent=23 // pred_check_branch
          %580 = sbr.rel (%p578) target = $region28
        $region27: #{tpu_custom_call.1} parent=23 // pred_region
          %p581 = scmp.lt.s32.totalorder %s38, 1
          %s582 = scalar_select %p581, %s38, 1
          %s583 = smul.addr %s582, 3
          %s584 = smul.addr %s583, 8
          %s585 = scalar_lea.vmem %s0, %s584
        $region28: #{tpu_custom_call.1} parent=23 // pred_fallthru
          _
        // Predicated region
        $region29: #{tpu_custom_call.1} parent=23 // pred_check
          %p586 = pneg %p89
        $region30: #{tpu_custom_call.1} parent=23 // pred_check_branch
          %588 = sbr.rel (%p586) target = $region32
        $region31: #{tpu_custom_call.1} parent=23 // pred_region
          %p589 = scmp.lt.s32.totalorder %s39, 1
          %s590 = scalar_select %p589, %s39, 1
          %s591 = smul.addr %s590, 4
          %s592 = smul.addr %s591, 4
          %s593 = scalar_lea.vmem %s1, %s592
        $region32: #{tpu_custom_call.1} parent=23 // pred_fallthru
          _
        // Predicated region
        $region33: #{tpu_custom_call.1} parent=23 // pred_check
          %p594 = pneg %p115
        $region34: #{tpu_custom_call.1} parent=23 // pred_check_branch
          %596 = sbr.rel (%p594) target = $region36
        $region35: #{tpu_custom_call.1} parent=23 // pred_region
          %p597 = scmp.lt.s32.totalorder %s39, 1
          %s598 = scalar_select %p597, %s39, 1
          %s599 = smul.addr %s598, 4
          %s600 = smul.addr %s599, 4
          %s601 = scalar_lea.vmem %s2, %s600
        $region36: #{tpu_custom_call.1} parent=23 // pred_fallthru
          _
        // Predicated region
        $region37: #{tpu_custom_call.1} parent=23 // pred_check
          %p602 = pneg %p141
        $region38: #{tpu_custom_call.1} parent=23 // pred_check_branch
          %604 = sbr.rel (%p602) target = $region40
        $region39: #{tpu_custom_call.1} parent=23 // pred_region
          %p605 = scmp.lt.s32.totalorder %s39, 1
          %s606 = scalar_select %p605, %s39, 1
          %s607 = smul.addr %s606, 4
          %s608 = smul.addr %s607, 4
          %s609 = scalar_lea.vmem %s3, %s608
        $region40: #{tpu_custom_call.1} parent=23 // pred_fallthru
          _
        // Predicated region
        $region41: #{tpu_custom_call.1} parent=23 // pred_check
          %p610 = pneg %p167
        $region42: #{tpu_custom_call.1} parent=23 // pred_check_branch
          %612 = sbr.rel (%p610) target = $region44
        $region43: #{tpu_custom_call.1} parent=23 // pred_region
          %s613 = sand.u32 %s157, 1
          %s614 = scalar_lea.sflag [#allocation4], %s613
          %s615 = sand.u32 %s157, 1
          %s616 = scalar_lea.vmem [#allocation3], %s615
          %s618 = ssub.s32 16, 16
          %619 = vsyncadd %s614, %s618
          %s620 = smul.addr %s39, 16
          %s621 = scalar_lea.hbm %s4, %s620
          %s623 = sshll.u32 %s616, 4
          %s624 = int_to_ptr.vmem [resolvable:$true] %s623
          %626 = dma.hbm_to_vmem [thread:$0]  %s621, 16, %s624, %s614
        $region44: #{tpu_custom_call.1} parent=23 // pred_fallthru
          _
        // Predicated region
        $region45: #{tpu_custom_call.1} parent=23 // pred_check
          %p627 = pneg %p193
        $region46: #{tpu_custom_call.1} parent=23 // pred_check_branch
          %629 = sbr.rel (%p627) target = $region48
        $region47: #{tpu_custom_call.1} parent=23 // pred_region
          %p630 = scmp.lt.s32.totalorder %s39, 1
          %s631 = scalar_select %p630, %s39, 1
          %s632 = scalar_lea.vmem %s5, %s631
        $region48: #{tpu_custom_call.1} parent=23 // pred_fallthru
          _
        // Predicated region
        $region49: #{tpu_custom_call.1} parent=23 // pred_check
          %p633 = pneg %p219
        $region50: #{tpu_custom_call.1} parent=23 // pred_check_branch
          %635 = sbr.rel (%p633) target = $region52
        $region51: #{tpu_custom_call.1} parent=23 // pred_region
          %p636 = scmp.lt.s32.totalorder %s39, 1
          %s637 = scalar_select %p636, %s39, 1
          %s638 = scalar_lea.vmem %s6, %s637
        $region52: #{tpu_custom_call.1} parent=23 // pred_fallthru
          _
        // Predicated region
        $region53: #{tpu_custom_call.1} parent=23 // pred_check
          %p639 = pneg %p245
        $region54: #{tpu_custom_call.1} parent=23 // pred_check_branch
          %641 = sbr.rel (%p639) target = $region56
        $region55: #{tpu_custom_call.1} parent=23 // pred_region
          %p642 = scmp.lt.s32.totalorder %s39, 1
          %s643 = scalar_select %p642, %s39, 1
          %s644 = smul.addr %s643, 4
          %s645 = smul.addr %s644, 4
          %s646 = scalar_lea.vmem %s7, %s645
        $region56: #{tpu_custom_call.1} parent=23 // pred_fallthru
          _
        // Predicated region
        $region57: #{tpu_custom_call.1} parent=23 // pred_check
          %p647 = pneg %p271
        $region58: #{tpu_custom_call.1} parent=23 // pred_check_branch
          %649 = sbr.rel (%p647) target = $region60
        $region59: #{tpu_custom_call.1} parent=23 // pred_region
          %p650 = scmp.lt.s32.totalorder %s39, 1
          %s651 = scalar_select %p650, %s39, 1
          %s652 = scalar_lea.vmem %s8, %s651
        $region60: #{tpu_custom_call.1} parent=23 // pred_fallthru
          _
        // Predicated region
        $region61: #{tpu_custom_call.1} parent=23 // pred_check
          %p653 = pneg %p297
        $region62: #{tpu_custom_call.1} parent=23 // pred_check_branch
          %655 = sbr.rel (%p653) target = $region64
        $region63: #{tpu_custom_call.1} parent=23 // pred_region
          %p656 = scmp.lt.s32.totalorder %s39, 1
          %s657 = scalar_select %p656, %s39, 1
          %s658 = scalar_lea.vmem %s9, %s657
        $region64: #{tpu_custom_call.1} parent=23 // pred_fallthru
          _
        // Predicated region
        $region65: #{tpu_custom_call.1} parent=23 // pred_check
          %p659 = pneg %p323
        $region66: #{tpu_custom_call.1} parent=23 // pred_check_branch
          %661 = sbr.rel (%p659) target = $region68
        $region67: #{tpu_custom_call.1} parent=23 // pred_region
          %p662 = scmp.lt.s32.totalorder %s39, 1
          %s663 = scalar_select %p662, %s39, 1
          %s664 = scalar_lea.vmem %s10, %s663
        $region68: #{tpu_custom_call.1} parent=23 // pred_fallthru
          _
        // Predicated region
        $region69: #{tpu_custom_call.1} parent=23 // pred_check
          %p665 = pneg %p349
        $region70: #{tpu_custom_call.1} parent=23 // pred_check_branch
          %667 = sbr.rel (%p665) target = $region72
        $region71: #{tpu_custom_call.1} parent=23 // pred_region
          %p668 = scmp.lt.s32.totalorder %s39, 1
          %s669 = scalar_select %p668, %s39, 1
          %s670 = smul.addr %s669, 4
          %s671 = smul.addr %s670, 4
          %s672 = scalar_lea.vmem %s11, %s671
        $region72: #{tpu_custom_call.1} parent=23 // pred_fallthru
          _
        // Predicated region
        $region73: #{tpu_custom_call.1} parent=23 // pred_check
          %p673 = pneg %p375
        $region74: #{tpu_custom_call.1} parent=23 // pred_check_branch
          %675 = sbr.rel (%p673) target = $region76
        $region75: #{tpu_custom_call.1} parent=23 // pred_region
          %p676 = scmp.lt.s32.totalorder %s39, 1
          %s677 = scalar_select %p676, %s39, 1
          %s678 = scalar_lea.vmem %s12, %s677
        $region76: #{tpu_custom_call.1} parent=23 // pred_fallthru
          _
        // Predicated region
        $region77: #{tpu_custom_call.1} parent=23 // pred_check
          %p679 = pneg %p401
        $region78: #{tpu_custom_call.1} parent=23 // pred_check_branch
          %681 = sbr.rel (%p679) target = $region80
        $region79: #{tpu_custom_call.1} parent=23 // pred_region
          %p682 = scmp.lt.s32.totalorder %s39, 1
          %s683 = scalar_select %p682, %s39, 1
          %s684 = smul.addr %s683, 8
          %s685 = smul.addr %s684, 4
          %s686 = scalar_lea.vmem %s13, %s685
        $region80: #{tpu_custom_call.1} parent=23 // pred_fallthru
          _
        // Predicated region
        $region81: #{tpu_custom_call.1} parent=23 // pred_check
          %p687 = pneg %p427
        $region82: #{tpu_custom_call.1} parent=23 // pred_check_branch
          %689 = sbr.rel (%p687) target = $region84
        $region83: #{tpu_custom_call.1} parent=23 // pred_region
          %p690 = scmp.lt.s32.totalorder %s39, 1
          %s691 = scalar_select %p690, %s39, 1
          %s692 = scalar_lea.vmem %s14, %s691
        $region84: #{tpu_custom_call.1} parent=23 // pred_fallthru
          _
        // Predicated region
        $region85: #{tpu_custom_call.1} parent=23 // pred_check
          %p693 = pneg %p453
        $region86: #{tpu_custom_call.1} parent=23 // pred_check_branch
          %695 = sbr.rel (%p693) target = $region88
        $region87: #{tpu_custom_call.1} parent=23 // pred_region
          %p696 = scmp.lt.s32.totalorder %s39, 1
          %s697 = scalar_select %p696, %s39, 1
          %s698 = scalar_lea.vmem %s15, %s697
        $region88: #{tpu_custom_call.1} parent=23 // pred_fallthru
          _
        // Predicated region
        $region89: #{tpu_custom_call.1} parent=23 // pred_check
          %p699 = pneg %p479
        $region90: #{tpu_custom_call.1} parent=23 // pred_check_branch
          %701 = sbr.rel (%p699) target = $region92
        $region91: #{tpu_custom_call.1} parent=23 // pred_region
          %p702 = scmp.lt.s32.totalorder %s39, 1
          %s703 = scalar_select %p702, %s39, 1
          %s704 = scalar_lea.vmem %s16, %s703
        $region92: #{tpu_custom_call.1} parent=23 // pred_fallthru
          _
      $region24: #{tpu_custom_call.1} parent=5 // pred_fallthru
        _
      %p705 = scmp.le.s32.totalorder 1, %s31
      %p706 = scmp.lt.s32.totalorder %s31, 5
      %p707 = pnand %p705, %p706
      %p708 = pneg %p707
      // Predicated region
      $region93: #{tpu_custom_call.1} parent=5 // pred_check
        _
      $region94: #{tpu_custom_call.1} parent=5 // pred_check_branch
        %710 = sbr.rel (%p707) target = $region96
      $region95: #{tpu_custom_call.1} parent=5 // pred_region
        %s711 = ssub.s32 %s31, 1
        %s712 = sand.u32 %s160, 1
        %s713 = scalar_lea.sflag [#allocation4], %s712
        %s714 = sand.u32 %s160, 1
        %s715 = scalar_lea.vmem [#allocation3], %s714
        // Predicated region
        $region97: #{tpu_custom_call.1} parent=95 // pred_check
          %p716 = pneg %p173
        $region98: #{tpu_custom_call.1} parent=95 // pred_check_branch
          %718 = sbr.rel (%p716) target = $region100
        $region99: #{tpu_custom_call.1} parent=95 // pred_region
          %719 = dma.done %s713, 16
        $region100: #{tpu_custom_call.1} parent=95 // pred_fallthru
          _
        %p720 = scmp.lt.s32.totalorder %s40, 1
        %s721 = scalar_select %p720, %s40, 1
        %s722 = smul.addr %s721, 3
        %s723 = smul.addr %s722, 8
        %s724 = scalar_lea.vmem %s0, %s723
        %p725 = pneg %p69
        %p726 = pneg %p66
        %p727 = scmp.lt.s32.totalorder %s41, 1
        %s728 = scalar_select %p727, %s41, 1
        %s729 = smul.addr %s728, 4
        %s730 = smul.addr %s729, 4
        %s731 = scalar_lea.vmem %s1, %s730
        %p732 = pneg %p95
        %p733 = pneg %p92
        %p734 = scmp.lt.s32.totalorder %s41, 1
        %s735 = scalar_select %p734, %s41, 1
        %s736 = smul.addr %s735, 4
        %s737 = smul.addr %s736, 4
        %s738 = scalar_lea.vmem %s2, %s737
        %p739 = pneg %p121
        %p740 = pneg %p118
        %p741 = scmp.lt.s32.totalorder %s41, 1
        %s742 = scalar_select %p741, %s41, 1
        %s743 = smul.addr %s742, 4
        %s744 = smul.addr %s743, 4
        %s745 = scalar_lea.vmem %s3, %s744
        %p746 = pneg %p147
        %p747 = pneg %p144
        %s748 = sand.u32 %s160, 1
        %s749 = scalar_lea.sflag [#allocation4], %s748
        %s750 = sand.u32 %s160, 1
        %s751 = scalar_lea.vmem [#allocation3], %s750
        %p752 = pneg %p173
        %p753 = pneg %p170
        %p754 = scmp.lt.s32.totalorder %s41, 1
        %s755 = scalar_select %p754, %s41, 1
        %s756 = scalar_lea.vmem %s5, %s755
        %p757 = pneg %p199
        %p758 = pneg %p196
        %p759 = scmp.lt.s32.totalorder %s41, 1
        %s760 = scalar_select %p759, %s41, 1
        %s761 = scalar_lea.vmem %s6, %s760
        %p762 = pneg %p225
        %p763 = pneg %p222
        %p764 = scmp.lt.s32.totalorder %s41, 1
        %s765 = scalar_select %p764, %s41, 1
        %s766 = smul.addr %s765, 4
        %s767 = smul.addr %s766, 4
        %s768 = scalar_lea.vmem %s7, %s767
        %p769 = pneg %p251
        %p770 = pneg %p248
        %p771 = scmp.lt.s32.totalorder %s41, 1
        %s772 = scalar_select %p771, %s41, 1
        %s773 = scalar_lea.vmem %s8, %s772
        %p774 = pneg %p277
        %p775 = pneg %p274
        %p776 = scmp.lt.s32.totalorder %s41, 1
        %s777 = scalar_select %p776, %s41, 1
        %s778 = scalar_lea.vmem %s9, %s777
        %p779 = pneg %p303
        %p780 = pneg %p300
        %p781 = scmp.lt.s32.totalorder %s41, 1
        %s782 = scalar_select %p781, %s41, 1
        %s783 = scalar_lea.vmem %s10, %s782
        %p784 = pneg %p329
        %p785 = pneg %p326
        %p786 = scmp.lt.s32.totalorder %s41, 1
        %s787 = scalar_select %p786, %s41, 1
        %s788 = smul.addr %s787, 4
        %s789 = smul.addr %s788, 4
        %s790 = scalar_lea.vmem %s11, %s789
        %p791 = pneg %p355
        %p792 = pneg %p352
        %p793 = scmp.lt.s32.totalorder %s41, 1
        %s794 = scalar_select %p793, %s41, 1
        %s795 = scalar_lea.vmem %s12, %s794
        %p796 = pneg %p381
        %p797 = pneg %p378
        %p798 = scmp.lt.s32.totalorder %s41, 1
        %s799 = scalar_select %p798, %s41, 1
        %s800 = smul.addr %s799, 8
        %s801 = smul.addr %s800, 4
        %s802 = scalar_lea.vmem %s13, %s801
        %p803 = pneg %p407
        %p804 = pneg %p404
        %p805 = scmp.lt.s32.totalorder %s41, 1
        %s806 = scalar_select %p805, %s41, 1
        %s807 = scalar_lea.vmem %s14, %s806
        %p808 = pneg %p433
        %p809 = pneg %p430
        %p810 = scmp.lt.s32.totalorder %s41, 1
        %s811 = scalar_select %p810, %s41, 1
        %s812 = scalar_lea.vmem %s15, %s811
        %p813 = pneg %p459
        %p814 = pneg %p456
        %p815 = scmp.lt.s32.totalorder %s41, 1
        %s816 = scalar_select %p815, %s41, 1
        %s817 = scalar_lea.vmem %s16, %s816
        %p818 = pneg %p485
        %p819 = pneg %p482
        %p820 = pneg %p506
        %p821 = pneg %p503
        %p822 = pneg %p527
        %p823 = pneg %p524
        %p824 = pneg %p553
        %p825 = pneg %p550
        %s826 = sand.u32 %s540, 1
        %s827 = scalar_lea.sflag [#allocation5], %s826
        %s828 = sand.u32 %s540, 1
        %s829 = scalar_lea.vmem [#allocation6], %s828
        %p830 = scmp.lt.s32.totalorder %s40, 1
        %s831 = scalar_select %p830, %s40, 1
        %s832 = smul.addr %s831, 3
        %s833 = smul.addr %s832, 8
        %s834 = scalar_lea.vmem %s0, %s833
        %p835 = scmp.lt.s32.totalorder %s41, 1
        %s836 = scalar_select %p835, %s41, 1
        %s837 = smul.addr %s836, 4
        %s838 = smul.addr %s837, 4
        %s839 = scalar_lea.vmem %s1, %s838
        %p840 = scmp.lt.s32.totalorder %s41, 1
        %s841 = scalar_select %p840, %s41, 1
        %s842 = smul.addr %s841, 4
        %s843 = smul.addr %s842, 4
        %s844 = scalar_lea.vmem %s2, %s843
        %p845 = scmp.lt.s32.totalorder %s41, 1
        %s846 = scalar_select %p845, %s41, 1
        %s847 = smul.addr %s846, 4
        %s848 = smul.addr %s847, 4
        %s849 = scalar_lea.vmem %s3, %s848
        %p850 = scmp.lt.s32.totalorder %s41, 1
        %s851 = scalar_select %p850, %s41, 1
        %s852 = scalar_lea.vmem %s5, %s851
        %p853 = scmp.lt.s32.totalorder %s41, 1
        %s854 = scalar_select %p853, %s41, 1
        %s855 = scalar_lea.vmem %s6, %s854
        %p856 = scmp.lt.s32.totalorder %s41, 1
        %s857 = scalar_select %p856, %s41, 1
        %s858 = smul.addr %s857, 4
        %s859 = smul.addr %s858, 4
        %s860 = scalar_lea.vmem %s7, %s859
        %p861 = scmp.lt.s32.totalorder %s41, 1
        %s862 = scalar_select %p861, %s41, 1
        %s863 = scalar_lea.vmem %s8, %s862
        %p864 = scmp.lt.s32.totalorder %s41, 1
        %s865 = scalar_select %p864, %s41, 1
        %s866 = scalar_lea.vmem %s9, %s865
        %p867 = scmp.lt.s32.totalorder %s41, 1
        %s868 = scalar_select %p867, %s41, 1
        %s869 = scalar_lea.vmem %s10, %s868
        %p870 = scmp.lt.s32.totalorder %s41, 1
        %s871 = scalar_select %p870, %s41, 1
        %s872 = smul.addr %s871, 4
        %s873 = smul.addr %s872, 4
        %s874 = scalar_lea.vmem %s11, %s873
        %p875 = scmp.lt.s32.totalorder %s41, 1
        %s876 = scalar_select %p875, %s41, 1
        %s877 = scalar_lea.vmem %s12, %s876
        %p878 = scmp.lt.s32.totalorder %s41, 1
        %s879 = scalar_select %p878, %s41, 1
        %s880 = smul.addr %s879, 8
        %s881 = smul.addr %s880, 4
        %s882 = scalar_lea.vmem %s13, %s881
        %p883 = scmp.lt.s32.totalorder %s41, 1
        %s884 = scalar_select %p883, %s41, 1
        %s885 = scalar_lea.vmem %s14, %s884
        %p886 = scmp.lt.s32.totalorder %s41, 1
        %s887 = scalar_select %p886, %s41, 1
        %s888 = scalar_lea.vmem %s15, %s887
        %p889 = scmp.lt.s32.totalorder %s41, 1
        %s890 = scalar_select %p889, %s41, 1
        %s891 = scalar_lea.vmem %s16, %s890
        %p893 = scmp.eq.s32.totalorder %s41, 0
        // Predicated region
        $region101: #{tpu_custom_call.1} parent=95 // pred_check
          %p894 = pneg %p893
        $region102: #{tpu_custom_call.1} parent=95 // pred_check_branch
          %896 = sbr.rel (%p894) target = $region104
        $region103: #{tpu_custom_call.1} parent=95 // pred_region
          %v897 = vld [vmem:[%s834] sm:$0xff]
          %v898 = vld [vmem:[%s834 + $0x8] sm:$0xff]
          %v899 = vld [vmem:[%s834 + $0x10] sm:$0x1]
          %vm900 = vcmask 261120
          %901 = vst.msk [vmem:[#allocation2] sm:$0xff] %vm900, %v897
          %902 = vst.msk [vmem:[#allocation2 + $0x8] sm:$0xff] %vm900, %v898
          %vm903 = vcmask 253952
          %904 = vst.msk [vmem:[#allocation2 + $0x10] sm:$0x1] %vm903, %v899
        $region104: #{tpu_custom_call.1} parent=95 // pred_fallthru
          _
        %v905 = vld [vmem:[#allocation2] sm:$0xff]
        %v906 = vld [vmem:[#allocation2 + $0x8] sm:$0xff]
        %v907 = vld [vmem:[#allocation2 + $0x10] sm:$0x1]
        %v908 = vpack.c.bf16 %v906, %v905
        %v909 = vpack.c.bf16 %v907, %v907
        %v910 = vld [vmem:[%s839] sm:$0xf]
        %v911 = vld [vmem:[%s839 + $0x4] sm:$0xf]
        %v912 = vld [vmem:[%s839 + $0x8] sm:$0xf]
        %v913 = vld [vmem:[%s839 + $0xc] sm:$0xf]
        %v914 = vld [vmem:[%s715] sm:$0x1]
        %v916 = vlaneseq
        %v917 = vshrl.u32 %v916, 7
        %v918 = vsub.s32 0, %v917
        %v919 = vrot.slane %v914, %v918
        %v925 = vunpack.c.l.b16 %v910
        %v926 = vunpack.c.l.b16 %v911
        %v927 = vunpack.c.l.b16 %v912
        %v928 = vunpack.c.l.b16 %v913
        %v929 = vpack.c.b16 %v926, %v925
        %v930 = vpack.c.b16 %v928, %v927
        %vm933 = vcmask 261120
        %v935 = vsel %vm933, %v908, 0
        %v938 = vsel %vm933, %v909, 0
        %940 = vmatprep.subr.bf16.mxu0 0
        %941 = vmatpush1.bf16.msra.mxu0 %v929
        %942 = vmatprep.subr.bf16.mxu0 0
        %943 = vmatpush1.bf16.msra.mxu0 %v930
        %944 = vmatprep.subr.bf16.mxu0 0
        %945 = vmatpush1.bf16.msra.mxu0 0
        %946 = vmatprep.subr.bf16.mxu0 0
        %947 = vmatpush1.bf16.msra.mxu0 0
        %948 = vmatprep.subr.bf16.mxu0 0
        %949 = vmatpush1.bf16.msra.mxu0 0
        %950 = vmatprep.subr.bf16.mxu0 0
        %951 = vmatpush1.bf16.msra.mxu0 0
        %952 = vmatprep.subr.bf16.mxu0 0
        %953 = vmatpush1.bf16.msra.mxu0 0
        %954 = vmatprep.subr.bf16.mxu0 0
        %955 = vmatpush1.bf16.msra.mxu0 0
        %956 = vmatprep.subr.bf16.mxu0 0
        %957 = vmatpush1.bf16.msra.mxu0 0
        %958 = vmatprep.subr.bf16.mxu0 0
        %959 = vmatpush1.bf16.msra.mxu0 0
        %960 = vmatprep.subr.bf16.mxu0 0
        %961 = vmatpush1.bf16.msra.mxu0 0
        %962 = vmatprep.subr.bf16.mxu0 0
        %963 = vmatpush1.bf16.msra.mxu0 0
        %964 = vmatprep.subr.bf16.mxu0 0
        %965 = vmatpush1.bf16.msra.mxu0 0
        %966 = vmatprep.subr.bf16.mxu0 0
        %967 = vmatpush1.bf16.msra.mxu0 0
        %968 = vmatprep.subr.bf16.mxu0 0
        %969 = vmatpush1.bf16.msra.mxu0 0
        %970 = vmatprep.subr.bf16.mxu0 0
        %971 = vmatpush1.bf16.msra.mxu0 0
        %972 = vmatprep.mubr.bf16.mxu0 0
        %973 = vmatmul.mubr.bf16.gmra.mrb[0].mxu0 %v935
        %v974 = vpop.f32.mrb[0].mxu0
        %v975 = vadd.f32 %v919, %v974
        %v976 = vpop.f32.mrb[0].mxu0
        %v977 = vpop.f32.mrb[0].mxu0
        %v978 = vadd.f32 %v919, %v977
        %v979 = vpop.f32.mrb[0].mxu0
        %980 = vmatprep.mubr.bf16.mxu0 0
        %981 = vmatmul.mubr.bf16.gmra.mrb[0].mxu0 %v938
        %v982 = vpop.f32.mrb[0].mxu0
        %v983 = vadd.f32 %v919, %v982
        %v984 = vpop.f32.mrb[0].mxu0
        %v985 = vpop.f32.mrb[0].mxu0
        %v986 = vpop.f32.mrb[0].mxu0
        %987 = vdwg.mxu0
        %v988 = vld [vmem:[%s844] sm:$0xf]
        %v989 = vld [vmem:[%s844 + $0x4] sm:$0xf]
        %v990 = vld [vmem:[%s844 + $0x8] sm:$0xf]
        %v991 = vld [vmem:[%s844 + $0xc] sm:$0xf]
        %v992 = vld [vmem:[%s852] sm:$0x1]
        %v994 = vlaneseq
        %v995 = vshrl.u32 %v994, 7
        %v996 = vsub.s32 0, %v995
        %v997 = vrot.slane %v992, %v996
        %v1003 = vunpack.c.l.b16 %v988
        %v1004 = vunpack.c.l.b16 %v989
        %v1005 = vunpack.c.l.b16 %v990
        %v1006 = vunpack.c.l.b16 %v991
        %v1007 = vpack.c.b16 %v1004, %v1003
        %v1008 = vpack.c.b16 %v1006, %v1005
        %1011 = vmatprep.subr.bf16.mxu0 0
        %1012 = vmatpush1.bf16.msra.mxu0 %v1007
        %1013 = vmatprep.subr.bf16.mxu0 0
        %1014 = vmatpush1.bf16.msra.mxu0 %v1008
        %1015 = vmatprep.subr.bf16.mxu0 0
        %1016 = vmatpush1.bf16.msra.mxu0 0
        %1017 = vmatprep.subr.bf16.mxu0 0
        %1018 = vmatpush1.bf16.msra.mxu0 0
        %1019 = vmatprep.subr.bf16.mxu0 0
        %1020 = vmatpush1.bf16.msra.mxu0 0
        %1021 = vmatprep.subr.bf16.mxu0 0
        %1022 = vmatpush1.bf16.msra.mxu0 0
        %1023 = vmatprep.subr.bf16.mxu0 0
        %1024 = vmatpush1.bf16.msra.mxu0 0
        %1025 = vmatprep.subr.bf16.mxu0 0
        %1026 = vmatpush1.bf16.msra.mxu0 0
        %1027 = vmatprep.subr.bf16.mxu0 0
        %1028 = vmatpush1.bf16.msra.mxu0 0
        %1029 = vmatprep.subr.bf16.mxu0 0
        %1030 = vmatpush1.bf16.msra.mxu0 0
        %1031 = vmatprep.subr.bf16.mxu0 0
        %1032 = vmatpush1.bf16.msra.mxu0 0
        %1033 = vmatprep.subr.bf16.mxu0 0
        %1034 = vmatpush1.bf16.msra.mxu0 0
        %1035 = vmatprep.subr.bf16.mxu0 0
        %1036 = vmatpush1.bf16.msra.mxu0 0
        %1037 = vmatprep.subr.bf16.mxu0 0
        %1038 = vmatpush1.bf16.msra.mxu0 0
        %1039 = vmatprep.subr.bf16.mxu0 0
        %1040 = vmatpush1.bf16.msra.mxu0 0
        %1041 = vmatprep.subr.bf16.mxu0 0
        %1042 = vmatpush1.bf16.msra.mxu0 0
        %1043 = vmatprep.mubr.bf16.mxu0 0
        %1044 = vmatmul.mubr.bf16.gmra.mrb[0].mxu0 %v935
        %v1045 = vpop.f32.mrb[0].mxu0
        %v1046 = vadd.f32 %v997, %v1045
        %v1047 = vpop.f32.mrb[0].mxu0
        %v1048 = vpop.f32.mrb[0].mxu0
        %v1049 = vadd.f32 %v997, %v1048
        %v1050 = vpop.f32.mrb[0].mxu0
        %1051 = vmatprep.mubr.bf16.mxu0 0
        %1052 = vmatmul.mubr.bf16.gmra.mrb[0].mxu0 %v938
        %v1053 = vpop.f32.mrb[0].mxu0
        %v1054 = vadd.f32 %v997, %v1053
        %v1055 = vpop.f32.mrb[0].mxu0
        %v1056 = vpop.f32.mrb[0].mxu0
        %v1057 = vpop.f32.mrb[0].mxu0
        %1058 = vdwg.mxu0
        %v1059 = vld [vmem:[%s849] sm:$0xf]
        %v1060 = vld [vmem:[%s849 + $0x4] sm:$0xf]
        %v1061 = vld [vmem:[%s849 + $0x8] sm:$0xf]
        %v1062 = vld [vmem:[%s849 + $0xc] sm:$0xf]
        %v1063 = vld [vmem:[%s855] sm:$0x1]
        %v1065 = vlaneseq
        %v1066 = vshrl.u32 %v1065, 7
        %v1067 = vsub.s32 0, %v1066
        %v1068 = vrot.slane %v1063, %v1067
        %v1074 = vunpack.c.l.b16 %v1059
        %v1075 = vunpack.c.l.b16 %v1060
        %v1076 = vunpack.c.l.b16 %v1061
        %v1077 = vunpack.c.l.b16 %v1062
        %v1078 = vpack.c.b16 %v1075, %v1074
        %v1079 = vpack.c.b16 %v1077, %v1076
        %1082 = vmatprep.subr.bf16.mxu0 0
        %1083 = vmatpush1.bf16.msra.mxu0 %v1078
        %1084 = vmatprep.subr.bf16.mxu0 0
        %1085 = vmatpush1.bf16.msra.mxu0 %v1079
        %1086 = vmatprep.subr.bf16.mxu0 0
        %1087 = vmatpush1.bf16.msra.mxu0 0
        %1088 = vmatprep.subr.bf16.mxu0 0
        %1089 = vmatpush1.bf16.msra.mxu0 0
        %1090 = vmatprep.subr.bf16.mxu0 0
        %1091 = vmatpush1.bf16.msra.mxu0 0
        %1092 = vmatprep.subr.bf16.mxu0 0
        %1093 = vmatpush1.bf16.msra.mxu0 0
        %1094 = vmatprep.subr.bf16.mxu0 0
        %1095 = vmatpush1.bf16.msra.mxu0 0
        %1096 = vmatprep.subr.bf16.mxu0 0
        %1097 = vmatpush1.bf16.msra.mxu0 0
        %1098 = vmatprep.subr.bf16.mxu0 0
        %1099 = vmatpush1.bf16.msra.mxu0 0
        %1100 = vmatprep.subr.bf16.mxu0 0
        %1101 = vmatpush1.bf16.msra.mxu0 0
        %1102 = vmatprep.subr.bf16.mxu0 0
        %1103 = vmatpush1.bf16.msra.mxu0 0
        %1104 = vmatprep.subr.bf16.mxu0 0
        %1105 = vmatpush1.bf16.msra.mxu0 0
        %1106 = vmatprep.subr.bf16.mxu0 0
        %1107 = vmatpush1.bf16.msra.mxu0 0
        %1108 = vmatprep.subr.bf16.mxu0 0
        %1109 = vmatpush1.bf16.msra.mxu0 0
        %1110 = vmatprep.subr.bf16.mxu0 0
        %1111 = vmatpush1.bf16.msra.mxu0 0
        %1112 = vmatprep.subr.bf16.mxu0 0
        %1113 = vmatpush1.bf16.msra.mxu0 0
        %1114 = vmatprep.mubr.bf16.mxu0 0
        %1115 = vmatmul.mubr.bf16.gmra.mrb[0].mxu0 %v935
        %v1116 = vpop.f32.mrb[0].mxu0
        %v1117 = vadd.f32 %v1068, %v1116
        %v1118 = vpop.f32.mrb[0].mxu0
        %v1119 = vpop.f32.mrb[0].mxu0
        %v1120 = vadd.f32 %v1068, %v1119
        %v1121 = vpop.f32.mrb[0].mxu0
        %1122 = vmatprep.mubr.bf16.mxu0 0
        %1123 = vmatmul.mubr.bf16.gmra.mrb[0].mxu0 %v938
        %v1124 = vpop.f32.mrb[0].mxu0
        %v1125 = vadd.f32 %v1068, %v1124
        %v1126 = vpop.f32.mrb[0].mxu0
        %v1127 = vpop.f32.mrb[0].mxu0
        %v1128 = vpop.f32.mrb[0].mxu0
        %1129 = vdwg.mxu0
        %v1130 = vpack.c.bf16 %v978, %v975
        %v1131 = vpack.c.bf16 %v983, %v983
        %v1132 = vpack.c.bf16 %v1049, %v1046
        %v1133 = vpack.c.bf16 %v1054, %v1054
        %v1134 = vpack.c.bf16 %v1120, %v1117
        %v1135 = vpack.c.bf16 %v1125, %v1125
        %vm1136 = vcmask 64512
        %v1138 = vsel %vm1136, %v1130, 0
        %v1141 = vsel %vm1136, %v1131, 0
        %v1144 = vsel %vm1136, %v1132, 0
        %v1147 = vsel %vm1136, %v1133, 0
        %1149 = vmatprep.subr.bf16.mxu0 0
        %1150 = vmatpush1.bf16.xpose.msra.mxu0 %v1144
        %1151 = vmatprep.subr.bf16.mxu0 0
        %1152 = vmatpush1.bf16.xpose.msra.mxu0 %v1147
        %1153 = vmatprep.subr.bf16.mxu0 0
        %1154 = vmatpush1.bf16.xpose.msra.mxu0 0
        %1155 = vmatprep.subr.bf16.mxu0 0
        %1156 = vmatpush1.bf16.xpose.msra.mxu0 0
        %1157 = vmatprep.subr.bf16.mxu0 0
        %1158 = vmatpush1.bf16.xpose.msra.mxu0 0
        %1159 = vmatprep.subr.bf16.mxu0 0
        %1160 = vmatpush1.bf16.xpose.msra.mxu0 0
        %1161 = vmatprep.subr.bf16.mxu0 0
        %1162 = vmatpush1.bf16.xpose.msra.mxu0 0
        %1163 = vmatprep.subr.bf16.mxu0 0
        %1164 = vmatpush1.bf16.xpose.msra.mxu0 0
        %1165 = vmatprep.subr.bf16.mxu0 0
        %1166 = vmatpush1.bf16.xpose.msra.mxu0 0
        %1167 = vmatprep.subr.bf16.mxu0 0
        %1168 = vmatpush1.bf16.xpose.msra.mxu0 0
        %1169 = vmatprep.subr.bf16.mxu0 0
        %1170 = vmatpush1.bf16.xpose.msra.mxu0 0
        %1171 = vmatprep.subr.bf16.mxu0 0
        %1172 = vmatpush1.bf16.xpose.msra.mxu0 0
        %1173 = vmatprep.subr.bf16.mxu0 0
        %1174 = vmatpush1.bf16.xpose.msra.mxu0 0
        %1175 = vmatprep.subr.bf16.mxu0 0
        %1176 = vmatpush1.bf16.xpose.msra.mxu0 0
        %1177 = vmatprep.subr.bf16.mxu0 0
        %1178 = vmatpush1.bf16.xpose.msra.mxu0 0
        %1179 = vmatprep.subr.bf16.mxu0 0
        %1180 = vmatpush1.bf16.xpose.msra.mxu0 0
        %1181 = vmatprep.mubr.bf16.mxu0 0
        %1182 = vmatmul.mubr.bf16.gmra.mrb[0].mxu0 %v1138
        %v1183 = vpop.f32.mrb[0].mxu0
        %v1184 = vadd.f32 0.0, %v1183
        %v1185 = vpop.f32.mrb[0].mxu0
        %v1186 = vpop.f32.mrb[0].mxu0
        %v1187 = vadd.f32 0.0, %v1186
        %v1188 = vpop.f32.mrb[0].mxu0
        %1189 = vmatprep.mubr.bf16.mxu0 0
        %1190 = vmatmul.mubr.bf16.gmra.mrb[0].mxu0 %v1141
        %v1191 = vpop.f32.mrb[0].mxu0
        %v1192 = vadd.f32 0.0, %v1191
        %v1193 = vpop.f32.mrb[0].mxu0
        %v1194 = vpop.f32.mrb[0].mxu0
        %v1195 = vpop.f32.mrb[0].mxu0
        %1196 = vdwg.mxu0
        %vm1197 = vcmask 138240
        %v1198 = vsel %vm1197, %v1184, -inf
        %1199 = vmax.xlane.f32.xlu0 %v1198
        %v1200 = vpop.xlane.xlu0 %1199
        %v1201 = vsel %vm1197, %v1187, -inf
        %1202 = vmax.xlane.f32.xlu0 %v1201
        %v1203 = vpop.xlane.xlu0 %1202
        %vm1204 = vcmask 131072
        %v1205 = vsel %vm1204, %v1192, -inf
        %1206 = vmax.xlane.f32.xlu0 %v1205
        %v1207 = vpop.xlane.xlu0 %1206
        %v1208 = vsub.f32 %v1184, %v1200
        %v1209 = vsub.f32 %v1187, %v1203
        %v1210 = vsub.f32 %v1192, %v1207
        %v1211 = vmul.f32 %v1208, 1.442695
        %v1212 = vpow.pop %v1211
        %v1213 = vmul.f32 %v1209, 1.442695
        %v1214 = vpow.pop %v1213
        %v1215 = vmul.f32 %v1210, 1.442695
        %v1216 = vpow.pop %v1215
        %v1217 = vsel %vm1197, %v1212, 0.0
        %1218 = vadd.xlane.f32.xlu0 %v1217
        %v1219 = vpop.xlane.xlu0 %1218
        %v1220 = vsel %vm1197, %v1214, 0.0
        %1221 = vadd.xlane.f32.xlu0 %v1220
        %v1222 = vpop.xlane.xlu0 %1221
        %v1223 = vsel %vm1204, %v1216, 0.0
        %1224 = vadd.xlane.f32.xlu0 %v1223
        %v1225 = vpop.xlane.xlu0 %1224
        %v1226 = vrcp.pop %v1219
        %v1227 = vrcp.pop %v1222
        %v1228 = vrcp.pop %v1225
        %v1229 = vmul.f32 %v1212, %v1226
        %v1230 = vmul.f32 %v1214, %v1227
        %v1231 = vmul.f32 %v1216, %v1228
        %v1232 = vpack.c.bf16 %v1230, %v1229
        %v1233 = vpack.c.bf16 %v1231, %v1231
        %v1235 = vsel %vm1197, %v1232, 0
        %v1238 = vsel %vm1197, %v1233, 0
        %vm1240 = vcmask 1040384
        %v1241 = vsel 0, 4294967295, 65535
        %v1242 = vsel %vm1240, %v1241, 0
        %v1244 = vand.u32 %v1135, %v1242
        %1246 = vmatprep.subr.bf16.mxu0 0
        %1247 = vmatpush1.bf16.msra.mxu0 %v1134
        %1248 = vmatprep.subr.bf16.mxu0 0
        %1249 = vmatpush1.bf16.msra.mxu0 %v1244
        %1250 = vmatprep.subr.bf16.mxu0 0
        %1251 = vmatpush1.bf16.msra.mxu0 0
        %1252 = vmatprep.subr.bf16.mxu0 0
        %1253 = vmatpush1.bf16.msra.mxu0 0
        %1254 = vmatprep.subr.bf16.mxu0 0
        %1255 = vmatpush1.bf16.msra.mxu0 0
        %1256 = vmatprep.subr.bf16.mxu0 0
        %1257 = vmatpush1.bf16.msra.mxu0 0
        %1258 = vmatprep.subr.bf16.mxu0 0
        %1259 = vmatpush1.bf16.msra.mxu0 0
        %1260 = vmatprep.subr.bf16.mxu0 0
        %1261 = vmatpush1.bf16.msra.mxu0 0
        %1262 = vmatprep.subr.bf16.mxu0 0
        %1263 = vmatpush1.bf16.msra.mxu0 0
        %1264 = vmatprep.subr.bf16.mxu0 0
        %1265 = vmatpush1.bf16.msra.mxu0 0
        %1266 = vmatprep.subr.bf16.mxu0 0
        %1267 = vmatpush1.bf16.msra.mxu0 0
        %1268 = vmatprep.subr.bf16.mxu0 0
        %1269 = vmatpush1.bf16.msra.mxu0 0
        %1270 = vmatprep.subr.bf16.mxu0 0
        %1271 = vmatpush1.bf16.msra.mxu0 0
        %1272 = vmatprep.subr.bf16.mxu0 0
        %1273 = vmatpush1.bf16.msra.mxu0 0
        %1274 = vmatprep.subr.bf16.mxu0 0
        %1275 = vmatpush1.bf16.msra.mxu0 0
        %1276 = vmatprep.subr.bf16.mxu0 0
        %1277 = vmatpush1.bf16.msra.mxu0 0
        %1278 = vmatprep.mubr.bf16.mxu0 0
        %1279 = vmatmul.mubr.bf16.gmra.mrb[0].mxu0 %v1235
        %v1280 = vpop.f32.mrb[0].mxu0
        %v1281 = vadd.f32 0.0, %v1280
        %v1282 = vpop.f32.mrb[0].mxu0
        %v1283 = vpop.f32.mrb[0].mxu0
        %v1284 = vadd.f32 0.0, %v1283
        %v1285 = vpop.f32.mrb[0].mxu0
        %1286 = vmatprep.mubr.bf16.mxu0 0
        %1287 = vmatmul.mubr.bf16.gmra.mrb[0].mxu0 %v1238
        %v1288 = vpop.f32.mrb[0].mxu0
        %v1289 = vadd.f32 0.0, %v1288
        %v1290 = vpop.f32.mrb[0].mxu0
        %v1291 = vpop.f32.mrb[0].mxu0
        %v1292 = vpop.f32.mrb[0].mxu0
        %1293 = vdwg.mxu0
        %1296 = vrot.lane.b32.xlu0 %v1130, 120
        %v1297 = vpop.permute.xlu0 %1296
        %1298 = vrot.lane.b32.xlu0 %v1131, 120
        %v1299 = vpop.permute.xlu0 %1298
        %1302 = vrot.lane.b32.xlu0 %v1132, 120
        %v1303 = vpop.permute.xlu0 %1302
        %1304 = vrot.lane.b32.xlu0 %v1133, 120
        %v1305 = vpop.permute.xlu0 %1304
        %v1307 = vsel %vm1136, %v1297, 0
        %v1310 = vsel %vm1136, %v1299, 0
        %v1313 = vsel %vm1136, %v1303, 0
        %v1316 = vsel %vm1136, %v1305, 0
        %1318 = vmatprep.subr.bf16.mxu0 0
        %1319 = vmatpush1.bf16.xpose.msra.mxu0 %v1313
        %1320 = vmatprep.subr.bf16.mxu0 0
        %1321 = vmatpush1.bf16.xpose.msra.mxu0 %v1316
        %1322 = vmatprep.subr.bf16.mxu0 0
        %1323 = vmatpush1.bf16.xpose.msra.mxu0 0
        %1324 = vmatprep.subr.bf16.mxu0 0
        %1325 = vmatpush1.bf16.xpose.msra.mxu0 0
        %1326 = vmatprep.subr.bf16.mxu0 0
        %1327 = vmatpush1.bf16.xpose.msra.mxu0 0
        %1328 = vmatprep.subr.bf16.mxu0 0
        %1329 = vmatpush1.bf16.xpose.msra.mxu0 0
        %1330 = vmatprep.subr.bf16.mxu0 0
        %1331 = vmatpush1.bf16.xpose.msra.mxu0 0
        %1332 = vmatprep.subr.bf16.mxu0 0
        %1333 = vmatpush1.bf16.xpose.msra.mxu0 0
        %1334 = vmatprep.subr.bf16.mxu0 0
        %1335 = vmatpush1.bf16.xpose.msra.mxu0 0
        %1336 = vmatprep.subr.bf16.mxu0 0
        %1337 = vmatpush1.bf16.xpose.msra.mxu0 0
        %1338 = vmatprep.subr.bf16.mxu0 0
        %1339 = vmatpush1.bf16.xpose.msra.mxu0 0
        %1340 = vmatprep.subr.bf16.mxu0 0
        %1341 = vmatpush1.bf16.xpose.msra.mxu0 0
        %1342 = vmatprep.subr.bf16.mxu0 0
        %1343 = vmatpush1.bf16.xpose.msra.mxu0 0
        %1344 = vmatprep.subr.bf16.mxu0 0
        %1345 = vmatpush1.bf16.xpose.msra.mxu0 0
        %1346 = vmatprep.subr.bf16.mxu0 0
        %1347 = vmatpush1.bf16.xpose.msra.mxu0 0
        %1348 = vmatprep.subr.bf16.mxu0 0
        %1349 = vmatpush1.bf16.xpose.msra.mxu0 0
        %1350 = vmatprep.mubr.bf16.mxu0 0
        %1351 = vmatmul.mubr.bf16.gmra.mrb[0].mxu0 %v1307
        %v1352 = vpop.f32.mrb[0].mxu0
        %v1353 = vadd.f32 0.0, %v1352
        %v1354 = vpop.f32.mrb[0].mxu0
        %v1355 = vpop.f32.mrb[0].mxu0
        %v1356 = vadd.f32 0.0, %v1355
        %v1357 = vpop.f32.mrb[0].mxu0
        %1358 = vmatprep.mubr.bf16.mxu0 0
        %1359 = vmatmul.mubr.bf16.gmra.mrb[0].mxu0 %v1310
        %v1360 = vpop.f32.mrb[0].mxu0
        %v1361 = vadd.f32 0.0, %v1360
        %v1362 = vpop.f32.mrb[0].mxu0
        %v1363 = vpop.f32.mrb[0].mxu0
        %v1364 = vpop.f32.mrb[0].mxu0
        %1365 = vdwg.mxu0
        %v1366 = vsel %vm1197, %v1353, -inf
        %1367 = vmax.xlane.f32.xlu0 %v1366
        %v1368 = vpop.xlane.xlu0 %1367
        %v1369 = vsel %vm1197, %v1356, -inf
        %1370 = vmax.xlane.f32.xlu0 %v1369
        %v1371 = vpop.xlane.xlu0 %1370
        %v1372 = vsel %vm1204, %v1361, -inf
        %1373 = vmax.xlane.f32.xlu0 %v1372
        %v1374 = vpop.xlane.xlu0 %1373
        %v1375 = vsub.f32 %v1353, %v1368
        %v1376 = vsub.f32 %v1356, %v1371
        %v1377 = vsub.f32 %v1361, %v1374
        %v1378 = vmul.f32 %v1375, 1.442695
        %v1379 = vpow.pop %v1378
        %v1380 = vmul.f32 %v1376, 1.442695
        %v1381 = vpow.pop %v1380
        %v1382 = vmul.f32 %v1377, 1.442695
        %v1383 = vpow.pop %v1382
        %v1384 = vsel %vm1197, %v1379, 0.0
        %1385 = vadd.xlane.f32.xlu0 %v1384
        %v1386 = vpop.xlane.xlu0 %1385
        %v1387 = vsel %vm1197, %v1381, 0.0
        %1388 = vadd.xlane.f32.xlu0 %v1387
        %v1389 = vpop.xlane.xlu0 %1388
        %v1390 = vsel %vm1204, %v1383, 0.0
        %1391 = vadd.xlane.f32.xlu0 %v1390
        %v1392 = vpop.xlane.xlu0 %1391
        %v1393 = vrcp.pop %v1386
        %v1394 = vrcp.pop %v1389
        %v1395 = vrcp.pop %v1392
        %v1396 = vmul.f32 %v1379, %v1393
        %v1397 = vmul.f32 %v1381, %v1394
        %v1398 = vmul.f32 %v1383, %v1395
        %v1399 = vpack.c.bf16 %v1397, %v1396
        %v1400 = vpack.c.bf16 %v1398, %v1398
        %1403 = vrot.lane.b32.xlu0 %v1134, 120
        %v1404 = vpop.permute.xlu0 %1403
        %1405 = vrot.lane.b32.xlu0 %v1135, 120
        %v1406 = vpop.permute.xlu0 %1405
        %v1409 = vsel %vm1197, %v1399, 0
        %v1412 = vsel %vm1197, %v1400, 0
        %v1415 = vand.u32 %v1406, %v1242
        %1417 = vmatprep.subr.bf16.mxu0 0
        %1418 = vmatpush1.bf16.msra.mxu0 %v1404
        %1419 = vmatprep.subr.bf16.mxu0 0
        %1420 = vmatpush1.bf16.msra.mxu0 %v1415
        %1421 = vmatprep.subr.bf16.mxu0 0
        %1422 = vmatpush1.bf16.msra.mxu0 0
        %1423 = vmatprep.subr.bf16.mxu0 0
        %1424 = vmatpush1.bf16.msra.mxu0 0
        %1425 = vmatprep.subr.bf16.mxu0 0
        %1426 = vmatpush1.bf16.msra.mxu0 0
        %1427 = vmatprep.subr.bf16.mxu0 0
        %1428 = vmatpush1.bf16.msra.mxu0 0
        %1429 = vmatprep.subr.bf16.mxu0 0
        %1430 = vmatpush1.bf16.msra.mxu0 0
        %1431 = vmatprep.subr.bf16.mxu0 0
        %1432 = vmatpush1.bf16.msra.mxu0 0
        %1433 = vmatprep.subr.bf16.mxu0 0
        %1434 = vmatpush1.bf16.msra.mxu0 0
        %1435 = vmatprep.subr.bf16.mxu0 0
        %1436 = vmatpush1.bf16.msra.mxu0 0
        %1437 = vmatprep.subr.bf16.mxu0 0
        %1438 = vmatpush1.bf16.msra.mxu0 0
        %1439 = vmatprep.subr.bf16.mxu0 0
        %1440 = vmatpush1.bf16.msra.mxu0 0
        %1441 = vmatprep.subr.bf16.mxu0 0
        %1442 = vmatpush1.bf16.msra.mxu0 0
        %1443 = vmatprep.subr.bf16.mxu0 0
        %1444 = vmatpush1.bf16.msra.mxu0 0
        %1445 = vmatprep.subr.bf16.mxu0 0
        %1446 = vmatpush1.bf16.msra.mxu0 0
        %1447 = vmatprep.subr.bf16.mxu0 0
        %1448 = vmatpush1.bf16.msra.mxu0 0
        %1449 = vmatprep.mubr.bf16.mxu0 0
        %1450 = vmatmul.mubr.bf16.gmra.mrb[0].mxu0 %v1409
        %v1451 = vpop.f32.mrb[0].mxu0
        %v1452 = vadd.f32 0.0, %v1451
        %v1453 = vpop.f32.mrb[0].mxu0
        %v1454 = vpop.f32.mrb[0].mxu0
        %v1455 = vadd.f32 0.0, %v1454
        %v1456 = vpop.f32.mrb[0].mxu0
        %1457 = vmatprep.mubr.bf16.mxu0 0
        %1458 = vmatmul.mubr.bf16.gmra.mrb[0].mxu0 %v1412
        %v1459 = vpop.f32.mrb[0].mxu0
        %v1460 = vadd.f32 0.0, %v1459
        %v1461 = vpop.f32.mrb[0].mxu0
        %v1462 = vpop.f32.mrb[0].mxu0
        %v1463 = vpop.f32.mrb[0].mxu0
        %1464 = vdwg.mxu0
        %1465 = vrot.lane.b32.xlu0 %v1130, 112
        %v1466 = vpop.permute.xlu0 %1465
        %1467 = vrot.lane.b32.xlu0 %v1131, 112
        %v1468 = vpop.permute.xlu0 %1467
        %1469 = vrot.lane.b32.xlu0 %v1132, 112
        %v1470 = vpop.permute.xlu0 %1469
        %1471 = vrot.lane.b32.xlu0 %v1133, 112
        %v1472 = vpop.permute.xlu0 %1471
        %v1474 = vsel %vm1136, %v1466, 0
        %v1477 = vsel %vm1136, %v1468, 0
        %v1480 = vsel %vm1136, %v1470, 0
        %v1483 = vsel %vm1136, %v1472, 0
        %1485 = vmatprep.subr.bf16.mxu0 0
        %1486 = vmatpush1.bf16.xpose.msra.mxu0 %v1480
        %1487 = vmatprep.subr.bf16.mxu0 0
        %1488 = vmatpush1.bf16.xpose.msra.mxu0 %v1483
        %1489 = vmatprep.subr.bf16.mxu0 0
        %1490 = vmatpush1.bf16.xpose.msra.mxu0 0
        %1491 = vmatprep.subr.bf16.mxu0 0
        %1492 = vmatpush1.bf16.xpose.msra.mxu0 0
        %1493 = vmatprep.subr.bf16.mxu0 0
        %1494 = vmatpush1.bf16.xpose.msra.mxu0 0
        %1495 = vmatprep.subr.bf16.mxu0 0
        %1496 = vmatpush1.bf16.xpose.msra.mxu0 0
        %1497 = vmatprep.subr.bf16.mxu0 0
        %1498 = vmatpush1.bf16.xpose.msra.mxu0 0
        %1499 = vmatprep.subr.bf16.mxu0 0
        %1500 = vmatpush1.bf16.xpose.msra.mxu0 0
        %1501 = vmatprep.subr.bf16.mxu0 0
        %1502 = vmatpush1.bf16.xpose.msra.mxu0 0
        %1503 = vmatprep.subr.bf16.mxu0 0
        %1504 = vmatpush1.bf16.xpose.msra.mxu0 0
        %1505 = vmatprep.subr.bf16.mxu0 0
        %1506 = vmatpush1.bf16.xpose.msra.mxu0 0
        %1507 = vmatprep.subr.bf16.mxu0 0
        %1508 = vmatpush1.bf16.xpose.msra.mxu0 0
        %1509 = vmatprep.subr.bf16.mxu0 0
        %1510 = vmatpush1.bf16.xpose.msra.mxu0 0
        %1511 = vmatprep.subr.bf16.mxu0 0
        %1512 = vmatpush1.bf16.xpose.msra.mxu0 0
        %1513 = vmatprep.subr.bf16.mxu0 0
        %1514 = vmatpush1.bf16.xpose.msra.mxu0 0
        %1515 = vmatprep.subr.bf16.mxu0 0
        %1516 = vmatpush1.bf16.xpose.msra.mxu0 0
        %1517 = vmatprep.mubr.bf16.mxu0 0
        %1518 = vmatmul.mubr.bf16.gmra.mrb[0].mxu0 %v1474
        %v1519 = vpop.f32.mrb[0].mxu0
        %v1520 = vadd.f32 0.0, %v1519
        %v1521 = vpop.f32.mrb[0].mxu0
        %v1522 = vpop.f32.mrb[0].mxu0
        %v1523 = vadd.f32 0.0, %v1522
        %v1524 = vpop.f32.mrb[0].mxu0
        %1525 = vmatprep.mubr.bf16.mxu0 0
        %1526 = vmatmul.mubr.bf16.gmra.mrb[0].mxu0 %v1477
        %v1527 = vpop.f32.mrb[0].mxu0
        %v1528 = vadd.f32 0.0, %v1527
        %v1529 = vpop.f32.mrb[0].mxu0
        %v1530 = vpop.f32.mrb[0].mxu0
        %v1531 = vpop.f32.mrb[0].mxu0
        %1532 = vdwg.mxu0
        %v1533 = vsel %vm1197, %v1520, -inf
        %1534 = vmax.xlane.f32.xlu0 %v1533
        %v1535 = vpop.xlane.xlu0 %1534
        %v1536 = vsel %vm1197, %v1523, -inf
        %1537 = vmax.xlane.f32.xlu0 %v1536
        %v1538 = vpop.xlane.xlu0 %1537
        %v1539 = vsel %vm1204, %v1528, -inf
        %1540 = vmax.xlane.f32.xlu0 %v1539
        %v1541 = vpop.xlane.xlu0 %1540
        %v1542 = vsub.f32 %v1520, %v1535
        %v1543 = vsub.f32 %v1523, %v1538
        %v1544 = vsub.f32 %v1528, %v1541
        %v1545 = vmul.f32 %v1542, 1.442695
        %v1546 = vpow.pop %v1545
        %v1547 = vmul.f32 %v1543, 1.442695
        %v1548 = vpow.pop %v1547
        %v1549 = vmul.f32 %v1544, 1.442695
        %v1550 = vpow.pop %v1549
        %v1551 = vsel %vm1197, %v1546, 0.0
        %1552 = vadd.xlane.f32.xlu0 %v1551
        %v1553 = vpop.xlane.xlu0 %1552
        %v1554 = vsel %vm1197, %v1548, 0.0
        %1555 = vadd.xlane.f32.xlu0 %v1554
        %v1556 = vpop.xlane.xlu0 %1555
        %v1557 = vsel %vm1204, %v1550, 0.0
        %1558 = vadd.xlane.f32.xlu0 %v1557
        %v1559 = vpop.xlane.xlu0 %1558
        %v1560 = vrcp.pop %v1553
        %v1561 = vrcp.pop %v1556
        %v1562 = vrcp.pop %v1559
        %v1563 = vmul.f32 %v1546, %v1560
        %v1564 = vmul.f32 %v1548, %v1561
        %v1565 = vmul.f32 %v1550, %v1562
        %v1566 = vpack.c.bf16 %v1564, %v1563
        %v1567 = vpack.c.bf16 %v1565, %v1565
        %1568 = vrot.lane.b32.xlu0 %v1134, 112
        %v1569 = vpop.permute.xlu0 %1568
        %1570 = vrot.lane.b32.xlu0 %v1135, 112
        %v1571 = vpop.permute.xlu0 %1570
        %v1574 = vsel %vm1197, %v1566, 0
        %v1577 = vsel %vm1197, %v1567, 0
        %v1580 = vand.u32 %v1571, %v1242
        %1582 = vmatprep.subr.bf16.mxu0 0
        %1583 = vmatpush1.bf16.msra.mxu0 %v1569
        %1584 = vmatprep.subr.bf16.mxu0 0
        %1585 = vmatpush1.bf16.msra.mxu0 %v1580
        %1586 = vmatprep.subr.bf16.mxu0 0
        %1587 = vmatpush1.bf16.msra.mxu0 0
        %1588 = vmatprep.subr.bf16.mxu0 0
        %1589 = vmatpush1.bf16.msra.mxu0 0
        %1590 = vmatprep.subr.bf16.mxu0 0
        %1591 = vmatpush1.bf16.msra.mxu0 0
        %1592 = vmatprep.subr.bf16.mxu0 0
        %1593 = vmatpush1.bf16.msra.mxu0 0
        %1594 = vmatprep.subr.bf16.mxu0 0
        %1595 = vmatpush1.bf16.msra.mxu0 0
        %1596 = vmatprep.subr.bf16.mxu0 0
        %1597 = vmatpush1.bf16.msra.mxu0 0
        %1598 = vmatprep.subr.bf16.mxu0 0
        %1599 = vmatpush1.bf16.msra.mxu0 0
        %1600 = vmatprep.subr.bf16.mxu0 0
        %1601 = vmatpush1.bf16.msra.mxu0 0
        %1602 = vmatprep.subr.bf16.mxu0 0
        %1603 = vmatpush1.bf16.msra.mxu0 0
        %1604 = vmatprep.subr.bf16.mxu0 0
        %1605 = vmatpush1.bf16.msra.mxu0 0
        %1606 = vmatprep.subr.bf16.mxu0 0
        %1607 = vmatpush1.bf16.msra.mxu0 0
        %1608 = vmatprep.subr.bf16.mxu0 0
        %1609 = vmatpush1.bf16.msra.mxu0 0
        %1610 = vmatprep.subr.bf16.mxu0 0
        %1611 = vmatpush1.bf16.msra.mxu0 0
        %1612 = vmatprep.subr.bf16.mxu0 0
        %1613 = vmatpush1.bf16.msra.mxu0 0
        %1614 = vmatprep.mubr.bf16.mxu0 0
        %1615 = vmatmul.mubr.bf16.gmra.mrb[0].mxu0 %v1574
        %v1616 = vpop.f32.mrb[0].mxu0
        %v1617 = vadd.f32 0.0, %v1616
        %v1618 = vpop.f32.mrb[0].mxu0
        %v1619 = vpop.f32.mrb[0].mxu0
        %v1620 = vadd.f32 0.0, %v1619
        %v1621 = vpop.f32.mrb[0].mxu0
        %1622 = vmatprep.mubr.bf16.mxu0 0
        %1623 = vmatmul.mubr.bf16.gmra.mrb[0].mxu0 %v1577
        %v1624 = vpop.f32.mrb[0].mxu0
        %v1625 = vadd.f32 0.0, %v1624
        %v1626 = vpop.f32.mrb[0].mxu0
        %v1627 = vpop.f32.mrb[0].mxu0
        %v1628 = vpop.f32.mrb[0].mxu0
        %1629 = vdwg.mxu0
        %1630 = vrot.lane.b32.xlu0 %v1130, 104
        %v1631 = vpop.permute.xlu0 %1630
        %1632 = vrot.lane.b32.xlu0 %v1131, 104
        %v1633 = vpop.permute.xlu0 %1632
        %1634 = vrot.lane.b32.xlu0 %v1132, 104
        %v1635 = vpop.permute.xlu0 %1634
        %1636 = vrot.lane.b32.xlu0 %v1133, 104
        %v1637 = vpop.permute.xlu0 %1636
        %v1639 = vsel %vm1136, %v1631, 0
        %v1642 = vsel %vm1136, %v1633, 0
        %v1645 = vsel %vm1136, %v1635, 0
        %v1648 = vsel %vm1136, %v1637, 0
        %1650 = vmatprep.subr.bf16.mxu0 0
        %1651 = vmatpush1.bf16.xpose.msra.mxu0 %v1645
        %1652 = vmatprep.subr.bf16.mxu0 0
        %1653 = vmatpush1.bf16.xpose.msra.mxu0 %v1648
        %1654 = vmatprep.subr.bf16.mxu0 0
        %1655 = vmatpush1.bf16.xpose.msra.mxu0 0
        %1656 = vmatprep.subr.bf16.mxu0 0
        %1657 = vmatpush1.bf16.xpose.msra.mxu0 0
        %1658 = vmatprep.subr.bf16.mxu0 0
        %1659 = vmatpush1.bf16.xpose.msra.mxu0 0
        %1660 = vmatprep.subr.bf16.mxu0 0
        %1661 = vmatpush1.bf16.xpose.msra.mxu0 0
        %1662 = vmatprep.subr.bf16.mxu0 0
        %1663 = vmatpush1.bf16.xpose.msra.mxu0 0
        %1664 = vmatprep.subr.bf16.mxu0 0
        %1665 = vmatpush1.bf16.xpose.msra.mxu0 0
        %1666 = vmatprep.subr.bf16.mxu0 0
        %1667 = vmatpush1.bf16.xpose.msra.mxu0 0
        %1668 = vmatprep.subr.bf16.mxu0 0
        %1669 = vmatpush1.bf16.xpose.msra.mxu0 0
        %1670 = vmatprep.subr.bf16.mxu0 0
        %1671 = vmatpush1.bf16.xpose.msra.mxu0 0
        %1672 = vmatprep.subr.bf16.mxu0 0
        %1673 = vmatpush1.bf16.xpose.msra.mxu0 0
        %1674 = vmatprep.subr.bf16.mxu0 0
        %1675 = vmatpush1.bf16.xpose.msra.mxu0 0
        %1676 = vmatprep.subr.bf16.mxu0 0
        %1677 = vmatpush1.bf16.xpose.msra.mxu0 0
        %1678 = vmatprep.subr.bf16.mxu0 0
        %1679 = vmatpush1.bf16.xpose.msra.mxu0 0
        %1680 = vmatprep.subr.bf16.mxu0 0
        %1681 = vmatpush1.bf16.xpose.msra.mxu0 0
        %1682 = vmatprep.mubr.bf16.mxu0 0
        %1683 = vmatmul.mubr.bf16.gmra.mrb[0].mxu0 %v1639
        %v1684 = vpop.f32.mrb[0].mxu0
        %v1685 = vadd.f32 0.0, %v1684
        %v1686 = vpop.f32.mrb[0].mxu0
        %v1687 = vpop.f32.mrb[0].mxu0
        %v1688 = vadd.f32 0.0, %v1687
        %v1689 = vpop.f32.mrb[0].mxu0
        %1690 = vmatprep.mubr.bf16.mxu0 0
        %1691 = vmatmul.mubr.bf16.gmra.mrb[0].mxu0 %v1642
        %v1692 = vpop.f32.mrb[0].mxu0
        %v1693 = vadd.f32 0.0, %v1692
        %v1694 = vpop.f32.mrb[0].mxu0
        %v1695 = vpop.f32.mrb[0].mxu0
        %v1696 = vpop.f32.mrb[0].mxu0
        %1697 = vdwg.mxu0
        %v1698 = vsel %vm1197, %v1685, -inf
        %1699 = vmax.xlane.f32.xlu0 %v1698
        %v1700 = vpop.xlane.xlu0 %1699
        %v1701 = vsel %vm1197, %v1688, -inf
        %1702 = vmax.xlane.f32.xlu0 %v1701
        %v1703 = vpop.xlane.xlu0 %1702
        %v1704 = vsel %vm1204, %v1693, -inf
        %1705 = vmax.xlane.f32.xlu0 %v1704
        %v1706 = vpop.xlane.xlu0 %1705
        %v1707 = vsub.f32 %v1685, %v1700
        %v1708 = vsub.f32 %v1688, %v1703
        %v1709 = vsub.f32 %v1693, %v1706
        %v1710 = vmul.f32 %v1707, 1.442695
        %v1711 = vpow.pop %v1710
        %v1712 = vmul.f32 %v1708, 1.442695
        %v1713 = vpow.pop %v1712
        %v1714 = vmul.f32 %v1709, 1.442695
        %v1715 = vpow.pop %v1714
        %v1716 = vsel %vm1197, %v1711, 0.0
        %1717 = vadd.xlane.f32.xlu0 %v1716
        %v1718 = vpop.xlane.xlu0 %1717
        %v1719 = vsel %vm1197, %v1713, 0.0
        %1720 = vadd.xlane.f32.xlu0 %v1719
        %v1721 = vpop.xlane.xlu0 %1720
        %v1722 = vsel %vm1204, %v1715, 0.0
        %1723 = vadd.xlane.f32.xlu0 %v1722
        %v1724 = vpop.xlane.xlu0 %1723
        %v1725 = vrcp.pop %v1718
        %v1726 = vrcp.pop %v1721
        %v1727 = vrcp.pop %v1724
        %v1728 = vmul.f32 %v1711, %v1725
        %v1729 = vmul.f32 %v1713, %v1726
        %v1730 = vmul.f32 %v1715, %v1727
        %v1731 = vpack.c.bf16 %v1729, %v1728
        %v1732 = vpack.c.bf16 %v1730, %v1730
        %1733 = vrot.lane.b32.xlu0 %v1134, 104
        %v1734 = vpop.permute.xlu0 %1733
        %1735 = vrot.lane.b32.xlu0 %v1135, 104
        %v1736 = vpop.permute.xlu0 %1735
        %v1739 = vsel %vm1197, %v1731, 0
        %v1742 = vsel %vm1197, %v1732, 0
        %v1745 = vand.u32 %v1736, %v1242
        %1747 = vmatprep.subr.bf16.mxu0 0
        %1748 = vmatpush1.bf16.msra.mxu0 %v1734
        %1749 = vmatprep.subr.bf16.mxu0 0
        %1750 = vmatpush1.bf16.msra.mxu0 %v1745
        %1751 = vmatprep.subr.bf16.mxu0 0
        %1752 = vmatpush1.bf16.msra.mxu0 0
        %1753 = vmatprep.subr.bf16.mxu0 0
        %1754 = vmatpush1.bf16.msra.mxu0 0
        %1755 = vmatprep.subr.bf16.mxu0 0
        %1756 = vmatpush1.bf16.msra.mxu0 0
        %1757 = vmatprep.subr.bf16.mxu0 0
        %1758 = vmatpush1.bf16.msra.mxu0 0
        %1759 = vmatprep.subr.bf16.mxu0 0
        %1760 = vmatpush1.bf16.msra.mxu0 0
        %1761 = vmatprep.subr.bf16.mxu0 0
        %1762 = vmatpush1.bf16.msra.mxu0 0
        %1763 = vmatprep.subr.bf16.mxu0 0
        %1764 = vmatpush1.bf16.msra.mxu0 0
        %1765 = vmatprep.subr.bf16.mxu0 0
        %1766 = vmatpush1.bf16.msra.mxu0 0
        %1767 = vmatprep.subr.bf16.mxu0 0
        %1768 = vmatpush1.bf16.msra.mxu0 0
        %1769 = vmatprep.subr.bf16.mxu0 0
        %1770 = vmatpush1.bf16.msra.mxu0 0
        %1771 = vmatprep.subr.bf16.mxu0 0
        %1772 = vmatpush1.bf16.msra.mxu0 0
        %1773 = vmatprep.subr.bf16.mxu0 0
        %1774 = vmatpush1.bf16.msra.mxu0 0
        %1775 = vmatprep.subr.bf16.mxu0 0
        %1776 = vmatpush1.bf16.msra.mxu0 0
        %1777 = vmatprep.subr.bf16.mxu0 0
        %1778 = vmatpush1.bf16.msra.mxu0 0
        %1779 = vmatprep.mubr.bf16.mxu0 0
        %1780 = vmatmul.mubr.bf16.gmra.mrb[0].mxu0 %v1739
        %v1781 = vpop.f32.mrb[0].mxu0
        %v1782 = vadd.f32 0.0, %v1781
        %v1783 = vpop.f32.mrb[0].mxu0
        %v1784 = vpop.f32.mrb[0].mxu0
        %v1785 = vadd.f32 0.0, %v1784
        %v1786 = vpop.f32.mrb[0].mxu0
        %1787 = vmatprep.mubr.bf16.mxu0 0
        %1788 = vmatmul.mubr.bf16.gmra.mrb[0].mxu0 %v1742
        %v1789 = vpop.f32.mrb[0].mxu0
        %v1790 = vadd.f32 0.0, %v1789
        %v1791 = vpop.f32.mrb[0].mxu0
        %v1792 = vpop.f32.mrb[0].mxu0
        %v1793 = vpop.f32.mrb[0].mxu0
        %1794 = vdwg.mxu0
        %1798 = vrot.lane.b32.xlu0 %v1452, 8
        %v1799 = vpop.permute.xlu0 %1798
        %1800 = vrot.lane.b32.xlu0 %v1455, 8
        %v1801 = vpop.permute.xlu0 %1800
        %1802 = vrot.lane.b32.xlu0 %v1460, 8
        %v1803 = vpop.permute.xlu0 %1802
        %1810 = vrot.lane.b32.xlu0 %v1617, 16
        %v1811 = vpop.permute.xlu0 %1810
        %1812 = vrot.lane.b32.xlu0 %v1620, 16
        %v1813 = vpop.permute.xlu0 %1812
        %1814 = vrot.lane.b32.xlu0 %v1625, 16
        %v1815 = vpop.permute.xlu0 %1814
        %1822 = vrot.lane.b32.xlu0 %v1782, 24
        %v1823 = vpop.permute.xlu0 %1822
        %1824 = vrot.lane.b32.xlu0 %v1785, 24
        %v1825 = vpop.permute.xlu0 %1824
        %1826 = vrot.lane.b32.xlu0 %v1790, 24
        %v1827 = vpop.permute.xlu0 %1826
        %v1831 = vsel %vm1136, %v1281, %v1799
        %v1832 = vsel %vm1136, %v1284, %v1801
        %v1833 = vsel %vm1136, %v1289, %v1803
        %vm1834 = vcmask 130048
        %v1835 = vsel %vm1834, %v1831, %v1811
        %v1836 = vsel %vm1834, %v1832, %v1813
        %v1837 = vsel %vm1834, %v1833, %v1815
        %vm1838 = vcmask 195584
        %v1839 = vsel %vm1838, %v1835, %v1823
        %v1840 = vsel %vm1838, %v1836, %v1825
        %v1841 = vsel %vm1838, %v1837, %v1827
        %v1842 = vpack.c.bf16 %v1840, %v1839
        %v1843 = vpack.c.bf16 %v1841, %v1841
        %v1844 = vld [vmem:[%s860] sm:$0xf]
        %v1845 = vld [vmem:[%s860 + $0x4] sm:$0xf]
        %v1846 = vld [vmem:[%s860 + $0x8] sm:$0xf]
        %v1847 = vld [vmem:[%s860 + $0xc] sm:$0xf]
        %v1848 = vld [vmem:[%s863] sm:$0x1]
        %v1850 = vlaneseq
        %v1851 = vshrl.u32 %v1850, 7
        %v1852 = vsub.s32 0, %v1851
        %v1853 = vrot.slane %v1848, %v1852
        %v1859 = vunpack.c.l.b16 %v1844
        %v1860 = vunpack.c.l.b16 %v1845
        %v1861 = vunpack.c.l.b16 %v1846
        %v1862 = vunpack.c.l.b16 %v1847
        %v1863 = vpack.c.b16 %v1860, %v1859
        %v1864 = vpack.c.b16 %v1862, %v1861
        %v1868 = vsel %vm933, %v1842, 0
        %v1871 = vsel %vm933, %v1843, 0
        %1873 = vmatprep.subr.bf16.mxu0 0
        %1874 = vmatpush1.bf16.msra.mxu0 %v1863
        %1875 = vmatprep.subr.bf16.mxu0 0
        %1876 = vmatpush1.bf16.msra.mxu0 %v1864
        %1877 = vmatprep.subr.bf16.mxu0 0
        %1878 = vmatpush1.bf16.msra.mxu0 0
        %1879 = vmatprep.subr.bf16.mxu0 0
        %1880 = vmatpush1.bf16.msra.mxu0 0
        %1881 = vmatprep.subr.bf16.mxu0 0
        %1882 = vmatpush1.bf16.msra.mxu0 0
        %1883 = vmatprep.subr.bf16.mxu0 0
        %1884 = vmatpush1.bf16.msra.mxu0 0
        %1885 = vmatprep.subr.bf16.mxu0 0
        %1886 = vmatpush1.bf16.msra.mxu0 0
        %1887 = vmatprep.subr.bf16.mxu0 0
        %1888 = vmatpush1.bf16.msra.mxu0 0
        %1889 = vmatprep.subr.bf16.mxu0 0
        %1890 = vmatpush1.bf16.msra.mxu0 0
        %1891 = vmatprep.subr.bf16.mxu0 0
        %1892 = vmatpush1.bf16.msra.mxu0 0
        %1893 = vmatprep.subr.bf16.mxu0 0
        %1894 = vmatpush1.bf16.msra.mxu0 0
        %1895 = vmatprep.subr.bf16.mxu0 0
        %1896 = vmatpush1.bf16.msra.mxu0 0
        %1897 = vmatprep.subr.bf16.mxu0 0
        %1898 = vmatpush1.bf16.msra.mxu0 0
        %1899 = vmatprep.subr.bf16.mxu0 0
        %1900 = vmatpush1.bf16.msra.mxu0 0
        %1901 = vmatprep.subr.bf16.mxu0 0
        %1902 = vmatpush1.bf16.msra.mxu0 0
        %1903 = vmatprep.subr.bf16.mxu0 0
        %1904 = vmatpush1.bf16.msra.mxu0 0
        %1905 = vmatprep.mubr.bf16.mxu0 0
        %1906 = vmatmul.mubr.bf16.gmra.mrb[0].mxu0 %v1868
        %v1907 = vpop.f32.mrb[0].mxu0
        %v1908 = vadd.f32 %v1853, %v1907
        %v1909 = vpop.f32.mrb[0].mxu0
        %v1910 = vpop.f32.mrb[0].mxu0
        %v1911 = vadd.f32 %v1853, %v1910
        %v1912 = vpop.f32.mrb[0].mxu0
        %1913 = vmatprep.mubr.bf16.mxu0 0
        %1914 = vmatmul.mubr.bf16.gmra.mrb[0].mxu0 %v1871
        %v1915 = vpop.f32.mrb[0].mxu0
        %v1916 = vadd.f32 %v1853, %v1915
        %v1917 = vpop.f32.mrb[0].mxu0
        %v1918 = vpop.f32.mrb[0].mxu0
        %v1919 = vpop.f32.mrb[0].mxu0
        %1920 = vdwg.mxu0
        %v1921 = vadd.f32 %v905, %v1908
        %v1922 = vadd.f32 %v906, %v1911
        %v1923 = vadd.f32 %v907, %v1916
        %v1924 = vsel %vm933, %v1921, 0.0
        %1925 = vadd.xlane.f32.xlu0 %v1924
        %v1926 = vpop.xlane.xlu0 %1925
        %v1927 = vsel %vm933, %v1922, 0.0
        %1928 = vadd.xlane.f32.xlu0 %v1927
        %v1929 = vpop.xlane.xlu0 %1928
        %vm1930 = vcmask 253952
        %v1931 = vsel %vm1930, %v1923, 0.0
        %1932 = vadd.xlane.f32.xlu0 %v1931
        %v1933 = vpop.xlane.xlu0 %1932
        %v1934 = vrcp.pop 32.0
        %v1935 = vmul.f32 %v1926, %v1934
        %v1936 = vmul.f32 %v1929, %v1934
        %v1937 = vmul.f32 %v1933, %v1934
        %v1938 = vsub.f32 %v1921, %v1935
        %v1939 = vsub.f32 %v1922, %v1936
        %v1940 = vsub.f32 %v1923, %v1937
        %v1941 = vmul.f32 %v1938, %v1938
        %v1942 = vmul.f32 %v1939, %v1939
        %v1943 = vmul.f32 %v1940, %v1940
        %v1944 = vsel %vm933, %v1941, 0.0
        %1945 = vadd.xlane.f32.xlu0 %v1944
        %v1946 = vpop.xlane.xlu0 %1945
        %v1947 = vsel %vm933, %v1942, 0.0
        %1948 = vadd.xlane.f32.xlu0 %v1947
        %v1949 = vpop.xlane.xlu0 %1948
        %v1950 = vsel %vm1930, %v1943, 0.0
        %1951 = vadd.xlane.f32.xlu0 %v1950
        %v1952 = vpop.xlane.xlu0 %1951
        %v1953 = vmul.f32 %v1946, %v1934
        %v1954 = vmul.f32 %v1949, %v1934
        %v1955 = vmul.f32 %v1952, %v1934
        %v1956 = vadd.f32 %v1953, 1e-05
        %v1957 = vadd.f32 %v1954, 1e-05
        %v1958 = vadd.f32 %v1955, 1e-05
        %v1959 = vrsqrt.pop %v1956
        %v1960 = vrsqrt.pop %v1957
        %v1961 = vrsqrt.pop %v1958
        %v1962 = vmul.f32 %v1938, %v1959
        %v1963 = vmul.f32 %v1939, %v1960
        %v1964 = vmul.f32 %v1940, %v1961
        %v1965 = vld [vmem:[%s866] sm:$0x1]
        %v1967 = vlaneseq
        %v1968 = vshrl.u32 %v1967, 7
        %v1969 = vsub.s32 0, %v1968
        %v1970 = vrot.slane %v1965, %v1969
        %v1972 = vmul.f32 %v1962, %v1970
        %v1973 = vmul.f32 %v1963, %v1970
        %v1974 = vmul.f32 %v1964, %v1970
        %v1975 = vld [vmem:[%s869] sm:$0x1]
        %v1977 = vlaneseq
        %v1978 = vshrl.u32 %v1977, 7
        %v1979 = vsub.s32 0, %v1978
        %v1980 = vrot.slane %v1975, %v1979
        %v1982 = vadd.f32 %v1972, %v1980
        %v1983 = vadd.f32 %v1973, %v1980
        %v1984 = vadd.f32 %v1974, %v1980
        %v1985 = vpack.c.bf16 %v1983, %v1982
        %v1986 = vpack.c.bf16 %v1984, %v1984
        %v1987 = vld [vmem:[%s874] sm:$0xf]
        %v1988 = vld [vmem:[%s874 + $0x4] sm:$0xf]
        %v1989 = vld [vmem:[%s874 + $0x8] sm:$0xf]
        %v1990 = vld [vmem:[%s874 + $0xc] sm:$0xf]
        %v1991 = vld [vmem:[%s877] sm:$0x1]
        %v1993 = vlaneseq
        %v1994 = vshrl.u32 %v1993, 7
        %v1995 = vsub.s32 0, %v1994
        %v1996 = vrot.slane %v1991, %v1995
        %v2002 = vunpack.c.l.b16 %v1987
        %v2003 = vunpack.c.l.b16 %v1988
        %v2004 = vunpack.c.l.b16 %v1989
        %v2005 = vunpack.c.l.b16 %v1990
        %v2006 = vpack.c.b16 %v2003, %v2002
        %v2007 = vpack.c.b16 %v2005, %v2004
        %v2011 = vsel %vm933, %v1985, 0
        %v2014 = vsel %vm933, %v1986, 0
        %2016 = vmatprep.subr.bf16.mxu0 0
        %2017 = vmatpush1.bf16.msra.mxu0 %v2006
        %2018 = vmatprep.subr.bf16.mxu0 0
        %2019 = vmatpush1.bf16.msra.mxu0 %v2007
        %2020 = vmatprep.subr.bf16.mxu0 0
        %2021 = vmatpush1.bf16.msra.mxu0 0
        %2022 = vmatprep.subr.bf16.mxu0 0
        %2023 = vmatpush1.bf16.msra.mxu0 0
        %2024 = vmatprep.subr.bf16.mxu0 0
        %2025 = vmatpush1.bf16.msra.mxu0 0
        %2026 = vmatprep.subr.bf16.mxu0 0
        %2027 = vmatpush1.bf16.msra.mxu0 0
        %2028 = vmatprep.subr.bf16.mxu0 0
        %2029 = vmatpush1.bf16.msra.mxu0 0
        %2030 = vmatprep.subr.bf16.mxu0 0
        %2031 = vmatpush1.bf16.msra.mxu0 0
        %2032 = vmatprep.subr.bf16.mxu0 0
        %2033 = vmatpush1.bf16.msra.mxu0 0
        %2034 = vmatprep.subr.bf16.mxu0 0
        %2035 = vmatpush1.bf16.msra.mxu0 0
        %2036 = vmatprep.subr.bf16.mxu0 0
        %2037 = vmatpush1.bf16.msra.mxu0 0
        %2038 = vmatprep.subr.bf16.mxu0 0
        %2039 = vmatpush1.bf16.msra.mxu0 0
        %2040 = vmatprep.subr.bf16.mxu0 0
        %2041 = vmatpush1.bf16.msra.mxu0 0
        %2042 = vmatprep.subr.bf16.mxu0 0
        %2043 = vmatpush1.bf16.msra.mxu0 0
        %2044 = vmatprep.subr.bf16.mxu0 0
        %2045 = vmatpush1.bf16.msra.mxu0 0
        %2046 = vmatprep.subr.bf16.mxu0 0
        %2047 = vmatpush1.bf16.msra.mxu0 0
        %2048 = vmatprep.mubr.bf16.mxu0 0
        %2049 = vmatmul.mubr.bf16.gmra.mrb[0].mxu0 %v2011
        %v2050 = vpop.f32.mrb[0].mxu0
        %v2051 = vadd.f32 %v1996, %v2050
        %v2052 = vpop.f32.mrb[0].mxu0
        %v2053 = vpop.f32.mrb[0].mxu0
        %v2054 = vadd.f32 %v1996, %v2053
        %v2055 = vpop.f32.mrb[0].mxu0
        %2056 = vmatprep.mubr.bf16.mxu0 0
        %2057 = vmatmul.mubr.bf16.gmra.mrb[0].mxu0 %v2014
        %v2058 = vpop.f32.mrb[0].mxu0
        %v2059 = vadd.f32 %v1996, %v2058
        %v2060 = vpop.f32.mrb[0].mxu0
        %v2061 = vpop.f32.mrb[0].mxu0
        %v2062 = vpop.f32.mrb[0].mxu0
        %2063 = vdwg.mxu0
        %v2064 = vmax.f32 %v2051, 0.0
        %v2065 = vmax.f32 %v2054, 0.0
        %v2066 = vmax.f32 %v2059, 0.0
        %v2067 = vpack.c.bf16 %v2065, %v2064
        %v2068 = vpack.c.bf16 %v2066, %v2066
        %v2069 = vld [vmem:[%s882] sm:$0xf]
        %v2070 = vld [vmem:[%s882 + $0x4] sm:$0xf]
        %v2071 = vld [vmem:[%s882 + $0x8] sm:$0xf]
        %v2072 = vld [vmem:[%s882 + $0xc] sm:$0xf]
        %v2073 = vld [vmem:[%s882 + $0x10] sm:$0xf]
        %v2074 = vld [vmem:[%s882 + $0x14] sm:$0xf]
        %v2075 = vld [vmem:[%s882 + $0x18] sm:$0xf]
        %v2076 = vld [vmem:[%s882 + $0x1c] sm:$0xf]
        %v2077 = vld [vmem:[%s885] sm:$0x1]
        %v2079 = vlaneseq
        %v2080 = vshrl.u32 %v2079, 7
        %v2081 = vsub.s32 0, %v2080
        %v2082 = vrot.slane %v2077, %v2081
        %v2092 = vunpack.c.l.b16 %v2069
        %v2093 = vunpack.c.l.b16 %v2070
        %v2094 = vunpack.c.l.b16 %v2071
        %v2095 = vunpack.c.l.b16 %v2072
        %v2096 = vunpack.c.l.b16 %v2073
        %v2097 = vunpack.c.l.b16 %v2074
        %v2098 = vunpack.c.l.b16 %v2075
        %v2099 = vunpack.c.l.b16 %v2076
        %v2100 = vpack.c.b16 %v2093, %v2092
        %v2101 = vpack.c.b16 %v2095, %v2094
        %v2102 = vpack.c.b16 %v2097, %v2096
        %v2103 = vpack.c.b16 %v2099, %v2098
        %vm2108 = vcmask 523264
        %v2110 = vsel %vm2108, %v2067, 0
        %v2113 = vsel %vm2108, %v2068, 0
        %2115 = vmatprep.subr.bf16.mxu0 0
        %2116 = vmatpush1.bf16.msra.mxu0 %v2100
        %2117 = vmatprep.subr.bf16.mxu0 0
        %2118 = vmatpush1.bf16.msra.mxu0 %v2101
        %2119 = vmatprep.subr.bf16.mxu0 0
        %2120 = vmatpush1.bf16.msra.mxu0 %v2102
        %2121 = vmatprep.subr.bf16.mxu0 0
        %2122 = vmatpush1.bf16.msra.mxu0 %v2103
        %2123 = vmatprep.subr.bf16.mxu0 0
        %2124 = vmatpush1.bf16.msra.mxu0 0
        %2125 = vmatprep.subr.bf16.mxu0 0
        %2126 = vmatpush1.bf16.msra.mxu0 0
        %2127 = vmatprep.subr.bf16.mxu0 0
        %2128 = vmatpush1.bf16.msra.mxu0 0
        %2129 = vmatprep.subr.bf16.mxu0 0
        %2130 = vmatpush1.bf16.msra.mxu0 0
        %2131 = vmatprep.subr.bf16.mxu0 0
        %2132 = vmatpush1.bf16.msra.mxu0 0
        %2133 = vmatprep.subr.bf16.mxu0 0
        %2134 = vmatpush1.bf16.msra.mxu0 0
        %2135 = vmatprep.subr.bf16.mxu0 0
        %2136 = vmatpush1.bf16.msra.mxu0 0
        %2137 = vmatprep.subr.bf16.mxu0 0
        %2138 = vmatpush1.bf16.msra.mxu0 0
        %2139 = vmatprep.subr.bf16.mxu0 0
        %2140 = vmatpush1.bf16.msra.mxu0 0
        %2141 = vmatprep.subr.bf16.mxu0 0
        %2142 = vmatpush1.bf16.msra.mxu0 0
        %2143 = vmatprep.subr.bf16.mxu0 0
        %2144 = vmatpush1.bf16.msra.mxu0 0
        %2145 = vmatprep.subr.bf16.mxu0 0
        %2146 = vmatpush1.bf16.msra.mxu0 0
        %2147 = vmatprep.mubr.bf16.mxu0 0
        %2148 = vmatmul.mubr.bf16.gmra.mrb[0].mxu0 %v2110
        %v2149 = vpop.f32.mrb[0].mxu0
        %v2150 = vadd.f32 %v2082, %v2149
        %v2151 = vpop.f32.mrb[0].mxu0
        %v2152 = vpop.f32.mrb[0].mxu0
        %v2153 = vadd.f32 %v2082, %v2152
        %v2154 = vpop.f32.mrb[0].mxu0
        %2155 = vmatprep.mubr.bf16.mxu0 0
        %2156 = vmatmul.mubr.bf16.gmra.mrb[0].mxu0 %v2113
        %v2157 = vpop.f32.mrb[0].mxu0
        %v2158 = vadd.f32 %v2082, %v2157
        %v2159 = vpop.f32.mrb[0].mxu0
        %v2160 = vpop.f32.mrb[0].mxu0
        %v2161 = vpop.f32.mrb[0].mxu0
        %2162 = vdwg.mxu0
        %v2163 = vadd.f32 %v1982, %v2150
        %v2164 = vadd.f32 %v1983, %v2153
        %v2165 = vadd.f32 %v1984, %v2158
        %v2166 = vsel %vm933, %v2163, 0.0
        %2167 = vadd.xlane.f32.xlu0 %v2166
        %v2168 = vpop.xlane.xlu0 %2167
        %v2169 = vsel %vm933, %v2164, 0.0
        %2170 = vadd.xlane.f32.xlu0 %v2169
        %v2171 = vpop.xlane.xlu0 %2170
        %v2172 = vsel %vm1930, %v2165, 0.0
        %2173 = vadd.xlane.f32.xlu0 %v2172
        %v2174 = vpop.xlane.xlu0 %2173
        %v2175 = vmul.f32 %v2168, %v1934
        %v2176 = vmul.f32 %v2171, %v1934
        %v2177 = vmul.f32 %v2174, %v1934
        %v2178 = vsub.f32 %v2163, %v2175
        %v2179 = vsub.f32 %v2164, %v2176
        %v2180 = vsub.f32 %v2165, %v2177
        %v2181 = vmul.f32 %v2178, %v2178
        %v2182 = vmul.f32 %v2179, %v2179
        %v2183 = vmul.f32 %v2180, %v2180
        %v2184 = vsel %vm933, %v2181, 0.0
        %2185 = vadd.xlane.f32.xlu0 %v2184
        %v2186 = vpop.xlane.xlu0 %2185
        %v2187 = vsel %vm933, %v2182, 0.0
        %2188 = vadd.xlane.f32.xlu0 %v2187
        %v2189 = vpop.xlane.xlu0 %2188
        %v2190 = vsel %vm1930, %v2183, 0.0
        %2191 = vadd.xlane.f32.xlu0 %v2190
        %v2192 = vpop.xlane.xlu0 %2191
        %v2193 = vmul.f32 %v2186, %v1934
        %v2194 = vmul.f32 %v2189, %v1934
        %v2195 = vmul.f32 %v2192, %v1934
        %v2196 = vadd.f32 %v2193, 1e-05
        %v2197 = vadd.f32 %v2194, 1e-05
        %v2198 = vadd.f32 %v2195, 1e-05
        %v2199 = vrsqrt.pop %v2196
        %v2200 = vrsqrt.pop %v2197
        %v2201 = vrsqrt.pop %v2198
        %v2202 = vmul.f32 %v2178, %v2199
        %v2203 = vmul.f32 %v2179, %v2200
        %v2204 = vmul.f32 %v2180, %v2201
        %v2205 = vld [vmem:[%s888] sm:$0x1]
        %v2207 = vlaneseq
        %v2208 = vshrl.u32 %v2207, 7
        %v2209 = vsub.s32 0, %v2208
        %v2210 = vrot.slane %v2205, %v2209
        %v2212 = vmul.f32 %v2202, %v2210
        %v2213 = vmul.f32 %v2203, %v2210
        %v2214 = vmul.f32 %v2204, %v2210
        %v2215 = vld [vmem:[%s891] sm:$0x1]
        %v2217 = vlaneseq
        %v2218 = vshrl.u32 %v2217, 7
        %v2219 = vsub.s32 0, %v2218
        %v2220 = vrot.slane %v2215, %v2219
        %v2222 = vadd.f32 %v2212, %v2220
        %v2223 = vadd.f32 %v2213, %v2220
        %v2224 = vadd.f32 %v2214, %v2220
        %2225 = vst.msk [vmem:[#allocation2] sm:$0xff] %vm933, %v2222
        %2226 = vst.msk [vmem:[#allocation2 + $0x8] sm:$0xff] %vm933, %v2223
        %2227 = vst.msk [vmem:[#allocation2 + $0x10] sm:$0x1] %vm1930, %v2224
        %p2228 = scmp.eq.s32.totalorder %s41, 1
        // Predicated region
        $region105: #{tpu_custom_call.1} parent=95 // pred_check
          %p2229 = pneg %p2228
        $region106: #{tpu_custom_call.1} parent=95 // pred_check_branch
          %2231 = sbr.rel (%p2229) target = $region108
        $region107: #{tpu_custom_call.1} parent=95 // pred_region
          %v2232 = vsel %vm1930, %v2222, 0.0
          %2233 = vadd.xlane.f32.xlu0 %v2232
          %v2234 = vpop.xlane.xlu0 %2233
          %v2235 = vmul.f32 %v2234, %v1934
          %v2236 = vsub.f32 %v2222, %v2235
          %v2237 = vmul.f32 %v2236, %v2236
          %v2238 = vsel %vm1930, %v2237, 0.0
          %2239 = vadd.xlane.f32.xlu0 %v2238
          %v2240 = vpop.xlane.xlu0 %2239
          %v2241 = vmul.f32 %v2240, %v1934
          %v2242 = vadd.f32 %v2241, 1e-05
          %v2243 = vrsqrt.pop %v2242
          %v2244 = vmul.f32 %v2236, %v2243
          %v2245 = vld [vmem:[%s17] sm:$0x1]
          %v2246 = vmul.f32 %v2244, %v2245
          %v2247 = vld [vmem:[%s18] sm:$0x1]
          %v2248 = vadd.f32 %v2246, %v2247
          %2249 = vst.msk [vmem:[%s829] sm:$0x1] %vm1930, %v2248
        $region108: #{tpu_custom_call.1} parent=95 // pred_fallthru
          _
        %s2250 = sand.u32 %s540, 1
        %s2251 = scalar_lea.sflag [#allocation5], %s2250
        %s2252 = sand.u32 %s540, 1
        %s2253 = scalar_lea.vmem [#allocation6], %s2252
        // Predicated region
        $region109: #{tpu_custom_call.1} parent=95 // pred_check
          %p2254 = pneg %p550
        $region110: #{tpu_custom_call.1} parent=95 // pred_check_branch
          %2256 = sbr.rel (%p2254) target = $region112
        $region111: #{tpu_custom_call.1} parent=95 // pred_region
          %s2258 = ssub.s32 16, 16
          %2259 = vsyncadd %s2251, %s2258
          %s2260 = smul.addr %s40, 16
          %s2261 = scalar_lea.hbm %s19, %s2260
          %s2263 = sshll.u32 %s2253, 4
          %s2264 = int_to_ptr.vmem [resolvable:$true] %s2263
          %2266 = dma.vmem_to_hbm [thread:$0]  %s2264, 16, %s2261, %s2251
        $region112: #{tpu_custom_call.1} parent=95 // pred_fallthru
          _
      $region96: #{tpu_custom_call.1} parent=5 // pred_fallthru
        _
      %p2267 = scmp.le.s32.totalorder 2, %s31
      // Predicated region
      $region113: #{tpu_custom_call.1} parent=5 // pred_check
        %p2268 = pneg %p2267
      $region114: #{tpu_custom_call.1} parent=5 // pred_check_branch
        %2270 = sbr.rel (%p2268) target = $region116
      $region115: #{tpu_custom_call.1} parent=5 // pred_region
        %s2271 = ssub.s32 %s31, 2
        // Predicated region
        $region117: #{tpu_custom_call.1} parent=115 // pred_check
          %p2272 = pneg %p556
        $region118: #{tpu_custom_call.1} parent=115 // pred_check_branch
          %2274 = sbr.rel (%p2272) target = $region120
        $region119: #{tpu_custom_call.1} parent=115 // pred_region
          %s2275 = sand.u32 %s541, 1
          %s2276 = scalar_lea.sflag [#allocation5], %s2275
          %s2277 = sand.u32 %s541, 1
          %s2278 = scalar_lea.vmem [#allocation6], %s2277
          %2279 = dma.done %s2276, 16
        $region120: #{tpu_custom_call.1} parent=115 // pred_fallthru
          _
      $region116: #{tpu_custom_call.1} parent=5 // pred_fallthru
        _
    $region6: #{tpu_custom_call.1} parent=1 // loop_footer
      %s35 = sadd.s32 1, %s31
    $region7: #{tpu_custom_call.1} parent=1 // loop_footer_branch
      %30 = sbr.rel target = $region3
    $region8: #{tpu_custom_call.1} parent=1 // loop_exit
      _
    %2280 = vsyncpa [#allocation4], 1
    %s2281 = scalar_lea.sflag [#allocation4], 1
    %2282 = vsyncpa %s2281, 1
    %2283 = vsyncpa [#allocation5], 1
    %s2284 = scalar_lea.sflag [#allocation5], 1
    %2285 = vsyncpa %s2284, 1

</llo_original>
